<compile_context>
chip_gen: v5e
topology: v5e:2x2
jax: 0.10.0
libtpu: 0.0.40
codegen_flags: <defaults>
</compile_context>

<pallas_src>
import functools

import jax
import jax.numpy as jnp
from jax import lax
from jax.experimental import pallas as pl
from jax.experimental.pallas import tpu as pltpu

_LANE = 128
_SUB = 8


def _round_up(v, m):
    return pl.cdiv(v, m) * m


def _leaky(x, slope):
    return jnp.where(x > 0, x, slope * x)


def _bf16_dot(a, b):
    """(M,K) @ (K,N) on the MXU with bf16 operands, f32 accumulation."""
    return jnp.dot(a.astype(jnp.bfloat16), b.astype(jnp.bfloat16),
                   preferred_element_type=jnp.float32)


def _bf16_dot_t(a, b):
    """Contract axis 0 of both operands: (E,N) x (E,C) -> (N,C)."""
    return lax.dot_general(a.astype(jnp.bfloat16), b.astype(jnp.bfloat16),
                           dimension_numbers=(((0,), (0,)), ((), ())),
                           preferred_element_type=jnp.float32)


def _net_kernel(src_ref, dst_ref, x_ref, kricci_ref, epoinc_ref,
                # conv1 params
                wlin1_ref, wh1_1_ref, wh2_1_ref, bh2_1_ref,
                wp1_1_ref, wp2_1_ref, bp2_1_ref, bias1_ref,
                # conv2 params
                wlin2_ref, wh1_2_ref, wh2_2_ref, bh2_2_ref,
                wp1_2_ref, wp2_2_ref, bp2_2_ref, bias2_ref,
                out_ref, *, alpha):
    f32 = jnp.float32
    bf16 = jnp.bfloat16
    e_pad = src_ref.shape[0]
    n_pad = x_ref.shape[0]

    # One-hot gather/scatter matrices built in-kernel from int32 edge indices.
    # Padded edge slots carry index == -1 -> all-zero rows (inert everywhere).
    node_iota = lax.broadcasted_iota(jnp.int32, (e_pad, n_pad), 1)
    ssrc = (src_ref[...] == node_iota).astype(bf16)     # (E, N) gather matrix
    sdst_t = (dst_ref[...] == node_iota).astype(bf16)   # (E, N) == scatter^T

    kricci = kricci_ref[...]
    epoinc = epoinc_ref[...]

    def gcn_layer(x_in, wlin, wh1, wh2, bh2, wp1, wp2, bp2, bias):
        # x = self.lin(x)   (Linear, no bias)
        x_lin = _bf16_dot(x_in, wlin[...])                                # (N, C)

        # edge_weight = self.hmpnn(k_ricci):
        #   Linear(nc, C, bias=False) -> LeakyReLU(0.2) -> Linear(C, C, bias=True)
        h = jnp.dot(kricci, wh1[...], preferred_element_type=f32)         # (E, C)
        h = _leaky(h, 0.2)
        ew = jnp.dot(h, wh2[...], preferred_element_type=f32) + bh2[...]

        # softmax(edge_weight, edge_index[0]) -- per-source-node grouped
        # softmax, column-wise.  Subtracting the global per-column max is a
        # group-constant shift (softmax-invariant) and numerically stable.
        col_max = jnp.max(ew, axis=0, keepdims=True)                      # (1, C)
        e_exp = jnp.exp(ew - col_max)                                     # (E, C), <= 1
        group_sum = _bf16_dot_t(ssrc, e_exp)                              # (N, C) scatter
        denom = _bf16_dot(ssrc, group_sum)                                # (E, C) gather
        ew_sm = e_exp * pl.reciprocal(denom + 1e-16, approx=True)

        # propagate: message = edge_weight * x_j ; scatter-add into targets
        x_j = _bf16_dot(ssrc, x_lin)                                      # (E, C)
        msg = ew_sm * x_j
        aggr = _bf16_dot_t(sdst_t, msg)                                   # (N, C)

        # p_weight = F.leaky_relu(self.ham(e_poinc))
        p = jnp.dot(epoinc, wp1[...], preferred_element_type=f32)         # (N, C)
        p = _leaky(p, 0.2)                                                # LeakyReLU(0.2)
        p = jnp.dot(p, wp2[...], preferred_element_type=f32) + bp2[...]
        p = _leaky(p, 0.01)                                               # F.leaky_relu

        return aggr + bias[...] + alpha * p                               # (N, C)

    # dropout(identity) -> conv1 -> elu -> dropout(identity) -> conv2
    h1 = gcn_layer(x_ref[...], wlin1_ref, wh1_1_ref, wh2_1_ref, bh2_1_ref,
                   wp1_1_ref, wp2_1_ref, bp2_1_ref, bias1_ref)
    h1 = jnp.where(h1 > 0, h1, jnp.exp(h1) - 1.0)                         # F.elu

    out = gcn_layer(h1, wlin2_ref, wh1_2_ref, wh2_2_ref, bh2_2_ref,
                    wp1_2_ref, wp2_2_ref, bp2_2_ref, bias2_ref)
    out_ref[...] = out.astype(out_ref.dtype)


def _pad2d(a, rows, cols):
    r, c = a.shape
    return jnp.pad(a.astype(jnp.float32), ((0, rows - r), (0, cols - c)))


def net_forward(x, edge_index, alpha, params, k_ricci, e_poinc, num_nodes):
    """Net.forward: dropout(id) -> conv1 -> elu -> dropout(id) -> conv2."""
    # gcn_norm's only surviving effect: self loops appended to edge_index.
    loops = jnp.arange(num_nodes, dtype=edge_index.dtype)
    ei = jnp.concatenate([edge_index, jnp.stack([loops, loops])], axis=1)  # (2, E')
    e = ei.shape[1]
    e_pad = _round_up(e, _SUB)
    n_pad = _round_up(num_nodes, _SUB)

    # Padded edge slots point at node id -1 so their one-hot rows are all
    # zero and they contribute nothing anywhere.
    pad_ids = jnp.full((e_pad - e,), -1, dtype=jnp.int32)
    src = jnp.concatenate([ei[0].astype(jnp.int32), pad_ids])[:, None]     # (E_pad, 1)
    dst = jnp.concatenate([ei[1].astype(jnp.int32), pad_ids])[:, None]     # (E_pad, 1)
    k_ricci_p = jnp.pad(k_ricci.astype(jnp.float32), ((0, e_pad - e), (0, 0)))
    e_poinc_p = jnp.pad(e_poinc.astype(jnp.float32),
                        ((0, n_pad - num_nodes), (0, 0)))

    num_features = x.shape[1]
    c1 = params["conv1"]["w_lin"].shape[1]
    c2 = params["conv2"]["w_lin"].shape[1]
    f_pad = _round_up(num_features, _LANE)
    c1_pad = _round_up(c1, _LANE)
    c2_pad = _round_up(c2, _LANE)

    x_p = _pad2d(x, n_pad, f_pad)

    def pad_layer(p, in_pad, out_pad):
        return (
            _pad2d(p["w_lin"], in_pad, out_pad),
            _pad2d(p["w_h1"], p["w_h1"].shape[0], out_pad),
            _pad2d(p["w_h2"], out_pad, out_pad),
            _pad2d(p["b_h2"], 1, out_pad),
            _pad2d(p["w_p1"], p["w_p1"].shape[0], out_pad),
            _pad2d(p["w_p2"], out_pad, out_pad),
            _pad2d(p["b_p2"], 1, out_pad),
            _pad2d(p["bias"], 1, out_pad),
        )

    conv1 = pad_layer(params["conv1"], f_pad, c1_pad)
    conv2 = pad_layer(params["conv2"], c1_pad, c2_pad)

    kernel = functools.partial(_net_kernel, alpha=float(alpha))

    args = (src, dst, x_p, k_ricci_p, e_poinc_p) + conv1 + conv2
    vmem = pl.BlockSpec(memory_space=pltpu.MemorySpace.VMEM)

    out = pl.pallas_call(
        kernel,
        out_shape=jax.ShapeDtypeStruct((n_pad, c2_pad), jnp.float32),
        in_specs=[vmem] * len(args),
        out_specs=vmem,
    )(*args)
    return out[:num_nodes, :c2]


def _init_conv_params(key, in_ch, out_ch, n_comp, n_comp_p):
    ks = jax.random.split(key, 8)
    s = lambda fan_in: 1.0 / jnp.sqrt(jnp.float32(fan_in))
    return {
        # Linear weights stored transposed: (in, out) so kernel does x @ W
        "w_lin": jax.random.normal(ks[0], (in_ch, out_ch), jnp.float32) * s(in_ch),
        "w_h1": jax.random.normal(ks[1], (n_comp, out_ch), jnp.float32) * s(n_comp),
        "w_h2": jax.random.normal(ks[2], (out_ch, out_ch), jnp.float32) * s(out_ch),
        "b_h2": jax.random.normal(ks[3], (1, out_ch), jnp.float32) * 0.1,
        "w_p1": jax.random.normal(ks[4], (n_comp_p, out_ch), jnp.float32) * s(n_comp_p),
        "w_p2": jax.random.normal(ks[5], (out_ch, out_ch), jnp.float32) * s(out_ch),
        "b_p2": jax.random.normal(ks[6], (1, out_ch), jnp.float32) * 0.1,
        "bias": jax.random.normal(ks[7], (1, out_ch), jnp.float32) * 0.1,
    }


if __name__ == "__main__":
    key = jax.random.PRNGKey(0)

    num_nodes = 16
    num_features = 32
    num_hidden = 32
    num_classes = 8
    n_components = 4      # k_ricci feature dim (per edge, incl. self loops)
    n_components_p = 8    # e_poinc feature dim (per node)
    alpha = 0.5

    # bidirectional ring graph, no self loops (self loops added in net_forward)
    idx = jnp.arange(num_nodes, dtype=jnp.int32)
    src = jnp.concatenate([idx, (idx + 1) % num_nodes])
    dst = jnp.concatenate([(idx + 1) % num_nodes, idx])
    edge_index = jnp.stack([src, dst])                      # (2, 32)
    num_edges_aug = edge_index.shape[1] + num_nodes         # 48 (after self loops)

    k_x, k_kr, k_ep, k_c1, k_c2 = jax.random.split(key, 5)
    x = jax.random.normal(k_x, (num_nodes, num_features), jnp.float32)
    k_ricci = jax.random.normal(k_kr, (num_edges_aug, n_components), jnp.float32)
    e_poinc = jax.random.normal(k_ep, (num_nodes, n_components_p), jnp.float32)

    params = {
        "conv1": _init_conv_params(k_c1, num_features, num_hidden,
                                   n_components, n_components_p),
        "conv2": _init_conv_params(k_c2, num_hidden, num_classes,
                                   n_components, n_components_p),
    }

    out = net_forward(x, edge_index, alpha, params, k_ricci, e_poinc, num_nodes)
    out = jax.block_until_ready(out)
    assert out.shape == (num_nodes, num_classes)
    assert bool(jnp.all(jnp.isfinite(out)))
    print("KERNEL_OK")
</pallas_src>

<mosaic_0001>
module attributes {stable_mosaic.version = 11 : i64} {
  func.func @_net_kernel(%arg0: memref<48x1xi32, #tpu.memory_space<vmem>>, %arg1: memref<48x1xi32, #tpu.memory_space<vmem>>, %arg2: memref<16x128xf32, #tpu.memory_space<vmem>>, %arg3: memref<48x4xf32, #tpu.memory_space<vmem>>, %arg4: memref<16x8xf32, #tpu.memory_space<vmem>>, %arg5: memref<128x128xf32, #tpu.memory_space<vmem>>, %arg6: memref<4x128xf32, #tpu.memory_space<vmem>>, %arg7: memref<128x128xf32, #tpu.memory_space<vmem>>, %arg8: memref<1x128xf32, #tpu.memory_space<vmem>>, %arg9: memref<8x128xf32, #tpu.memory_space<vmem>>, %arg10: memref<128x128xf32, #tpu.memory_space<vmem>>, %arg11: memref<1x128xf32, #tpu.memory_space<vmem>>, %arg12: memref<1x128xf32, #tpu.memory_space<vmem>>, %arg13: memref<128x128xf32, #tpu.memory_space<vmem>>, %arg14: memref<4x128xf32, #tpu.memory_space<vmem>>, %arg15: memref<128x128xf32, #tpu.memory_space<vmem>>, %arg16: memref<1x128xf32, #tpu.memory_space<vmem>>, %arg17: memref<8x128xf32, #tpu.memory_space<vmem>>, %arg18: memref<128x128xf32, #tpu.memory_space<vmem>>, %arg19: memref<1x128xf32, #tpu.memory_space<vmem>>, %arg20: memref<1x128xf32, #tpu.memory_space<vmem>>, %arg21: memref<16x128xf32, #tpu.memory_space<vmem>>) attributes {dimension_semantics = [], scalar_prefetch = 0 : i64, scratch_operands = 0 : i64, tpu.core_type = #tpu.core_type<tc>} {
    %0 = tpu.iota {dimensions = array<i32: 1>} : vector<48x16xi32>
    %c0 = arith.constant 0 : index
    %c0_0 = arith.constant 0 : index
    %1 = vector.load %arg0[%c0, %c0_0] : memref<48x1xi32, #tpu.memory_space<vmem>>, vector<48x1xi32>
    %2 = vector.broadcast %1 : vector<48x1xi32> to vector<48x16xi32>
    %3 = arith.cmpi eq, %2, %0 : vector<48x16xi32>
    %4 = arith.extui %3 : vector<48x16xi1> to vector<48x16xi32>
    %5 = arith.sitofp %4 : vector<48x16xi32> to vector<48x16xf32>
    %6 = arith.truncf %5 : vector<48x16xf32> to vector<48x16xbf16>
    %c0_1 = arith.constant 0 : index
    %c0_2 = arith.constant 0 : index
    %7 = vector.load %arg1[%c0_1, %c0_2] : memref<48x1xi32, #tpu.memory_space<vmem>>, vector<48x1xi32>
    %8 = vector.broadcast %7 : vector<48x1xi32> to vector<48x16xi32>
    %9 = arith.cmpi eq, %8, %0 : vector<48x16xi32>
    %10 = arith.extui %9 : vector<48x16xi1> to vector<48x16xi32>
    %11 = arith.sitofp %10 : vector<48x16xi32> to vector<48x16xf32>
    %12 = arith.truncf %11 : vector<48x16xf32> to vector<48x16xbf16>
    %c0_3 = arith.constant 0 : index
    %c0_4 = arith.constant 0 : index
    %13 = vector.load %arg3[%c0_3, %c0_4] : memref<48x4xf32, #tpu.memory_space<vmem>>, vector<48x4xf32>
    %c0_5 = arith.constant 0 : index
    %c0_6 = arith.constant 0 : index
    %14 = vector.load %arg4[%c0_5, %c0_6] : memref<16x8xf32, #tpu.memory_space<vmem>>, vector<16x8xf32>
    %c0_7 = arith.constant 0 : index
    %c0_8 = arith.constant 0 : index
    %15 = vector.load %arg2[%c0_7, %c0_8] : memref<16x128xf32, #tpu.memory_space<vmem>>, vector<16x128xf32>
    %c0_9 = arith.constant 0 : index
    %c0_10 = arith.constant 0 : index
    %16 = vector.load %arg5[%c0_9, %c0_10] : memref<128x128xf32, #tpu.memory_space<vmem>>, vector<128x128xf32>
    %17 = arith.truncf %15 : vector<16x128xf32> to vector<16x128xbf16>
    %18 = arith.truncf %16 : vector<128x128xf32> to vector<128x128xbf16>
    %cst = arith.constant dense<0.000000e+00> : vector<16x128xf32>
    %19 = tpu.matmul %17, %18, %cst {dimension_numbers = #tpu.dot_dimension_numbers<[1], [0], [0], [1], [0, 0, 1, 1], [], []>} : vector<16x128xbf16>, vector<128x128xbf16>, vector<16x128xf32> -> vector<16x128xf32>
    %c0_11 = arith.constant 0 : index
    %c0_12 = arith.constant 0 : index
    %20 = vector.load %arg6[%c0_11, %c0_12] : memref<4x128xf32, #tpu.memory_space<vmem>>, vector<4x128xf32>
    %cst_13 = arith.constant dense<0.000000e+00> : vector<48x128xf32>
    %21 = tpu.matmul %13, %20, %cst_13 {dimension_numbers = #tpu.dot_dimension_numbers<[1], [0], [0], [1], [0, 0, 1, 1], [], []>} : vector<48x4xf32>, vector<4x128xf32>, vector<48x128xf32> -> vector<48x128xf32>
    %cst_14 = arith.constant 0.000000e+00 : f32
    %22 = vector.broadcast %cst_14 : f32 to vector<48x128xf32>
    %23 = arith.cmpf ogt, %21, %22 : vector<48x128xf32>
    %cst_15 = arith.constant 2.000000e-01 : f32
    %24 = vector.broadcast %cst_15 : f32 to vector<48x128xf32>
    %25 = arith.mulf %24, %21 : vector<48x128xf32>
    %26 = arith.select %23, %21, %25 : vector<48x128xi1>, vector<48x128xf32>
    %c0_16 = arith.constant 0 : index
    %c0_17 = arith.constant 0 : index
    %27 = vector.load %arg7[%c0_16, %c0_17] : memref<128x128xf32, #tpu.memory_space<vmem>>, vector<128x128xf32>
    %cst_18 = arith.constant dense<0.000000e+00> : vector<48x128xf32>
    %28 = tpu.matmul %26, %27, %cst_18 {dimension_numbers = #tpu.dot_dimension_numbers<[1], [0], [0], [1], [0, 0, 1, 1], [], []>} : vector<48x128xf32>, vector<128x128xf32>, vector<48x128xf32> -> vector<48x128xf32>
    %c0_19 = arith.constant 0 : index
    %c0_20 = arith.constant 0 : index
    %29 = vector.load %arg8[%c0_19, %c0_20] : memref<1x128xf32, #tpu.memory_space<vmem>>, vector<1x128xf32>
    %30 = vector.broadcast %29 : vector<1x128xf32> to vector<48x128xf32>
    %31 = arith.addf %28, %30 : vector<48x128xf32>
    %cst_21 = arith.constant dense<0xFF800000> : vector<128xf32>
    %32 = vector.multi_reduction <maximumf>, %31, %cst_21 [0] : vector<48x128xf32> to vector<128xf32>
    %33 = vector.shape_cast %32 : vector<128xf32> to vector<1x128xf32>
    %34 = vector.broadcast %33 : vector<1x128xf32> to vector<48x128xf32>
    %35 = arith.subf %31, %34 : vector<48x128xf32>
    %36 = math.exp %35 : vector<48x128xf32>
    %37 = arith.truncf %36 : vector<48x128xf32> to vector<48x128xbf16>
    %cst_22 = arith.constant dense<0.000000e+00> : vector<16x128xf32>
    %38 = tpu.matmul %6, %37, %cst_22 {dimension_numbers = #tpu.dot_dimension_numbers<[0], [0], [1], [1], [0, 1, 1, 1], [], []>} : vector<48x16xbf16>, vector<48x128xbf16>, vector<16x128xf32> -> vector<16x128xf32>
    %39 = arith.truncf %38 : vector<16x128xf32> to vector<16x128xbf16>
    %cst_23 = arith.constant dense<0.000000e+00> : vector<48x128xf32>
    %40 = tpu.matmul %6, %39, %cst_23 {dimension_numbers = #tpu.dot_dimension_numbers<[1], [0], [0], [1], [0, 0, 1, 1], [], []>} : vector<48x16xbf16>, vector<16x128xbf16>, vector<48x128xf32> -> vector<48x128xf32>
    %cst_24 = arith.constant 1.000000e-16 : f32
    %41 = vector.broadcast %cst_24 : f32 to vector<48x128xf32>
    %42 = arith.addf %40, %41 : vector<48x128xf32>
    %43 = tpu.reciprocal %42 {approx = true} : vector<48x128xf32> -> vector<48x128xf32>
    %44 = arith.mulf %36, %43 : vector<48x128xf32>
    %45 = arith.truncf %19 : vector<16x128xf32> to vector<16x128xbf16>
    %cst_25 = arith.constant dense<0.000000e+00> : vector<48x128xf32>
    %46 = tpu.matmul %6, %45, %cst_25 {dimension_numbers = #tpu.dot_dimension_numbers<[1], [0], [0], [1], [0, 0, 1, 1], [], []>} : vector<48x16xbf16>, vector<16x128xbf16>, vector<48x128xf32> -> vector<48x128xf32>
    %47 = arith.mulf %44, %46 : vector<48x128xf32>
    %48 = arith.truncf %47 : vector<48x128xf32> to vector<48x128xbf16>
    %cst_26 = arith.constant dense<0.000000e+00> : vector<16x128xf32>
    %49 = tpu.matmul %12, %48, %cst_26 {dimension_numbers = #tpu.dot_dimension_numbers<[0], [0], [1], [1], [0, 1, 1, 1], [], []>} : vector<48x16xbf16>, vector<48x128xbf16>, vector<16x128xf32> -> vector<16x128xf32>
    %c0_27 = arith.constant 0 : index
    %c0_28 = arith.constant 0 : index
    %50 = vector.load %arg9[%c0_27, %c0_28] : memref<8x128xf32, #tpu.memory_space<vmem>>, vector<8x128xf32>
    %cst_29 = arith.constant dense<0.000000e+00> : vector<16x128xf32>
    %51 = tpu.matmul %14, %50, %cst_29 {dimension_numbers = #tpu.dot_dimension_numbers<[1], [0], [0], [1], [0, 0, 1, 1], [], []>} : vector<16x8xf32>, vector<8x128xf32>, vector<16x128xf32> -> vector<16x128xf32>
    %cst_30 = arith.constant 0.000000e+00 : f32
    %52 = vector.broadcast %cst_30 : f32 to vector<16x128xf32>
    %53 = arith.cmpf ogt, %51, %52 : vector<16x128xf32>
    %cst_31 = arith.constant 2.000000e-01 : f32
    %54 = vector.broadcast %cst_31 : f32 to vector<16x128xf32>
    %55 = arith.mulf %54, %51 : vector<16x128xf32>
    %56 = arith.select %53, %51, %55 : vector<16x128xi1>, vector<16x128xf32>
    %c0_32 = arith.constant 0 : index
    %c0_33 = arith.constant 0 : index
    %57 = vector.load %arg10[%c0_32, %c0_33] : memref<128x128xf32, #tpu.memory_space<vmem>>, vector<128x128xf32>
    %cst_34 = arith.constant dense<0.000000e+00> : vector<16x128xf32>
    %58 = tpu.matmul %56, %57, %cst_34 {dimension_numbers = #tpu.dot_dimension_numbers<[1], [0], [0], [1], [0, 0, 1, 1], [], []>} : vector<16x128xf32>, vector<128x128xf32>, vector<16x128xf32> -> vector<16x128xf32>
    %c0_35 = arith.constant 0 : index
    %c0_36 = arith.constant 0 : index
    %59 = vector.load %arg11[%c0_35, %c0_36] : memref<1x128xf32, #tpu.memory_space<vmem>>, vector<1x128xf32>
    %60 = vector.broadcast %59 : vector<1x128xf32> to vector<16x128xf32>
    %61 = arith.addf %58, %60 : vector<16x128xf32>
    %cst_37 = arith.constant 0.000000e+00 : f32
    %62 = vector.broadcast %cst_37 : f32 to vector<16x128xf32>
    %63 = arith.cmpf ogt, %61, %62 : vector<16x128xf32>
    %cst_38 = arith.constant 0.00999999977 : f32
    %64 = vector.broadcast %cst_38 : f32 to vector<16x128xf32>
    %65 = arith.mulf %64, %61 : vector<16x128xf32>
    %66 = arith.select %63, %61, %65 : vector<16x128xi1>, vector<16x128xf32>
    %c0_39 = arith.constant 0 : index
    %c0_40 = arith.constant 0 : index
    %67 = vector.load %arg12[%c0_39, %c0_40] : memref<1x128xf32, #tpu.memory_space<vmem>>, vector<1x128xf32>
    %68 = vector.broadcast %67 : vector<1x128xf32> to vector<16x128xf32>
    %69 = arith.addf %49, %68 : vector<16x128xf32>
    %cst_41 = arith.constant 5.000000e-01 : f32
    %70 = vector.broadcast %cst_41 : f32 to vector<16x128xf32>
    %71 = arith.mulf %70, %66 : vector<16x128xf32>
    %72 = arith.addf %69, %71 : vector<16x128xf32>
    %cst_42 = arith.constant 0.000000e+00 : f32
    %73 = vector.broadcast %cst_42 : f32 to vector<16x128xf32>
    %74 = arith.cmpf ogt, %72, %73 : vector<16x128xf32>
    %75 = math.exp %72 : vector<16x128xf32>
    %cst_43 = arith.constant 1.000000e+00 : f32
    %76 = vector.broadcast %cst_43 : f32 to vector<16x128xf32>
    %77 = arith.subf %75, %76 : vector<16x128xf32>
    %78 = arith.select %74, %72, %77 : vector<16x128xi1>, vector<16x128xf32>
    %c0_44 = arith.constant 0 : index
    %c0_45 = arith.constant 0 : index
    %79 = vector.load %arg13[%c0_44, %c0_45] : memref<128x128xf32, #tpu.memory_space<vmem>>, vector<128x128xf32>
    %80 = arith.truncf %78 : vector<16x128xf32> to vector<16x128xbf16>
    %81 = arith.truncf %79 : vector<128x128xf32> to vector<128x128xbf16>
    %cst_46 = arith.constant dense<0.000000e+00> : vector<16x128xf32>
    %82 = tpu.matmul %80, %81, %cst_46 {dimension_numbers = #tpu.dot_dimension_numbers<[1], [0], [0], [1], [0, 0, 1, 1], [], []>} : vector<16x128xbf16>, vector<128x128xbf16>, vector<16x128xf32> -> vector<16x128xf32>
    %c0_47 = arith.constant 0 : index
    %c0_48 = arith.constant 0 : index
    %83 = vector.load %arg14[%c0_47, %c0_48] : memref<4x128xf32, #tpu.memory_space<vmem>>, vector<4x128xf32>
    %cst_49 = arith.constant dense<0.000000e+00> : vector<48x128xf32>
    %84 = tpu.matmul %13, %83, %cst_49 {dimension_numbers = #tpu.dot_dimension_numbers<[1], [0], [0], [1], [0, 0, 1, 1], [], []>} : vector<48x4xf32>, vector<4x128xf32>, vector<48x128xf32> -> vector<48x128xf32>
    %cst_50 = arith.constant 0.000000e+00 : f32
    %85 = vector.broadcast %cst_50 : f32 to vector<48x128xf32>
    %86 = arith.cmpf ogt, %84, %85 : vector<48x128xf32>
    %cst_51 = arith.constant 2.000000e-01 : f32
    %87 = vector.broadcast %cst_51 : f32 to vector<48x128xf32>
    %88 = arith.mulf %87, %84 : vector<48x128xf32>
    %89 = arith.select %86, %84, %88 : vector<48x128xi1>, vector<48x128xf32>
    %c0_52 = arith.constant 0 : index
    %c0_53 = arith.constant 0 : index
    %90 = vector.load %arg15[%c0_52, %c0_53] : memref<128x128xf32, #tpu.memory_space<vmem>>, vector<128x128xf32>
    %cst_54 = arith.constant dense<0.000000e+00> : vector<48x128xf32>
    %91 = tpu.matmul %89, %90, %cst_54 {dimension_numbers = #tpu.dot_dimension_numbers<[1], [0], [0], [1], [0, 0, 1, 1], [], []>} : vector<48x128xf32>, vector<128x128xf32>, vector<48x128xf32> -> vector<48x128xf32>
    %c0_55 = arith.constant 0 : index
    %c0_56 = arith.constant 0 : index
    %92 = vector.load %arg16[%c0_55, %c0_56] : memref<1x128xf32, #tpu.memory_space<vmem>>, vector<1x128xf32>
    %93 = vector.broadcast %92 : vector<1x128xf32> to vector<48x128xf32>
    %94 = arith.addf %91, %93 : vector<48x128xf32>
    %cst_57 = arith.constant dense<0xFF800000> : vector<128xf32>
    %95 = vector.multi_reduction <maximumf>, %94, %cst_57 [0] : vector<48x128xf32> to vector<128xf32>
    %96 = vector.shape_cast %95 : vector<128xf32> to vector<1x128xf32>
    %97 = vector.broadcast %96 : vector<1x128xf32> to vector<48x128xf32>
    %98 = arith.subf %94, %97 : vector<48x128xf32>
    %99 = math.exp %98 : vector<48x128xf32>
    %100 = arith.truncf %99 : vector<48x128xf32> to vector<48x128xbf16>
    %cst_58 = arith.constant dense<0.000000e+00> : vector<16x128xf32>
    %101 = tpu.matmul %6, %100, %cst_58 {dimension_numbers = #tpu.dot_dimension_numbers<[0], [0], [1], [1], [0, 1, 1, 1], [], []>} : vector<48x16xbf16>, vector<48x128xbf16>, vector<16x128xf32> -> vector<16x128xf32>
    %102 = arith.truncf %101 : vector<16x128xf32> to vector<16x128xbf16>
    %cst_59 = arith.constant dense<0.000000e+00> : vector<48x128xf32>
    %103 = tpu.matmul %6, %102, %cst_59 {dimension_numbers = #tpu.dot_dimension_numbers<[1], [0], [0], [1], [0, 0, 1, 1], [], []>} : vector<48x16xbf16>, vector<16x128xbf16>, vector<48x128xf32> -> vector<48x128xf32>
    %cst_60 = arith.constant 1.000000e-16 : f32
    %104 = vector.broadcast %cst_60 : f32 to vector<48x128xf32>
    %105 = arith.addf %103, %104 : vector<48x128xf32>
    %106 = tpu.reciprocal %105 {approx = true} : vector<48x128xf32> -> vector<48x128xf32>
    %107 = arith.mulf %99, %106 : vector<48x128xf32>
    %108 = arith.truncf %82 : vector<16x128xf32> to vector<16x128xbf16>
    %cst_61 = arith.constant dense<0.000000e+00> : vector<48x128xf32>
    %109 = tpu.matmul %6, %108, %cst_61 {dimension_numbers = #tpu.dot_dimension_numbers<[1], [0], [0], [1], [0, 0, 1, 1], [], []>} : vector<48x16xbf16>, vector<16x128xbf16>, vector<48x128xf32> -> vector<48x128xf32>
    %110 = arith.mulf %107, %109 : vector<48x128xf32>
    %111 = arith.truncf %110 : vector<48x128xf32> to vector<48x128xbf16>
    %cst_62 = arith.constant dense<0.000000e+00> : vector<16x128xf32>
    %112 = tpu.matmul %12, %111, %cst_62 {dimension_numbers = #tpu.dot_dimension_numbers<[0], [0], [1], [1], [0, 1, 1, 1], [], []>} : vector<48x16xbf16>, vector<48x128xbf16>, vector<16x128xf32> -> vector<16x128xf32>
    %c0_63 = arith.constant 0 : index
    %c0_64 = arith.constant 0 : index
    %113 = vector.load %arg17[%c0_63, %c0_64] : memref<8x128xf32, #tpu.memory_space<vmem>>, vector<8x128xf32>
    %cst_65 = arith.constant dense<0.000000e+00> : vector<16x128xf32>
    %114 = tpu.matmul %14, %113, %cst_65 {dimension_numbers = #tpu.dot_dimension_numbers<[1], [0], [0], [1], [0, 0, 1, 1], [], []>} : vector<16x8xf32>, vector<8x128xf32>, vector<16x128xf32> -> vector<16x128xf32>
    %cst_66 = arith.constant 0.000000e+00 : f32
    %115 = vector.broadcast %cst_66 : f32 to vector<16x128xf32>
    %116 = arith.cmpf ogt, %114, %115 : vector<16x128xf32>
    %cst_67 = arith.constant 2.000000e-01 : f32
    %117 = vector.broadcast %cst_67 : f32 to vector<16x128xf32>
    %118 = arith.mulf %117, %114 : vector<16x128xf32>
    %119 = arith.select %116, %114, %118 : vector<16x128xi1>, vector<16x128xf32>
    %c0_68 = arith.constant 0 : index
    %c0_69 = arith.constant 0 : index
    %120 = vector.load %arg18[%c0_68, %c0_69] : memref<128x128xf32, #tpu.memory_space<vmem>>, vector<128x128xf32>
    %cst_70 = arith.constant dense<0.000000e+00> : vector<16x128xf32>
    %121 = tpu.matmul %119, %120, %cst_70 {dimension_numbers = #tpu.dot_dimension_numbers<[1], [0], [0], [1], [0, 0, 1, 1], [], []>} : vector<16x128xf32>, vector<128x128xf32>, vector<16x128xf32> -> vector<16x128xf32>
    %c0_71 = arith.constant 0 : index
    %c0_72 = arith.constant 0 : index
    %122 = vector.load %arg19[%c0_71, %c0_72] : memref<1x128xf32, #tpu.memory_space<vmem>>, vector<1x128xf32>
    %123 = vector.broadcast %122 : vector<1x128xf32> to vector<16x128xf32>
    %124 = arith.addf %121, %123 : vector<16x128xf32>
    %cst_73 = arith.constant 0.000000e+00 : f32
    %125 = vector.broadcast %cst_73 : f32 to vector<16x128xf32>
    %126 = arith.cmpf ogt, %124, %125 : vector<16x128xf32>
    %cst_74 = arith.constant 0.00999999977 : f32
    %127 = vector.broadcast %cst_74 : f32 to vector<16x128xf32>
    %128 = arith.mulf %127, %124 : vector<16x128xf32>
    %129 = arith.select %126, %124, %128 : vector<16x128xi1>, vector<16x128xf32>
    %c0_75 = arith.constant 0 : index
    %c0_76 = arith.constant 0 : index
    %130 = vector.load %arg20[%c0_75, %c0_76] : memref<1x128xf32, #tpu.memory_space<vmem>>, vector<1x128xf32>
    %131 = vector.broadcast %130 : vector<1x128xf32> to vector<16x128xf32>
    %132 = arith.addf %112, %131 : vector<16x128xf32>
    %cst_77 = arith.constant 5.000000e-01 : f32
    %133 = vector.broadcast %cst_77 : f32 to vector<16x128xf32>
    %134 = arith.mulf %133, %129 : vector<16x128xf32>
    %135 = arith.addf %132, %134 : vector<16x128xf32>
    %c0_78 = arith.constant 0 : index
    %c0_79 = arith.constant 0 : index
    %136 = vector.load %arg21[%c0_78, %c0_79] : memref<16x128xf32, #tpu.memory_space<vmem>>, vector<16x128xf32>
    tpu.vector_store %arg21[%c0_78, %c0_79], %135 {strides = array<i32>} : memref<16x128xf32, #tpu.memory_space<vmem>>, vector<16x128xf32>,
    return
  }
}

</mosaic_0001>

<llo_original>
// kernel: tpu_custom_call.1
$region0: #{tpu_custom_call.1}
  #allocation0 [shape = 'u32[]', space=smem, size = 0x4, offset = 0x4, fixed_abs, tag = 'smem constant byte address 0x4 - core index']
  #allocation1 [shape = 'u32[72,128]{1,0:T(1,128)}', space=vmem, size = 0x9000, scoped, tag = 'internal scratch']
  %s0 = inlined_call_operand.vmem [shape: s32[48,1], index: 0, kind: input, shape index: {}]
  %s1 = inlined_call_operand.vmem [shape: s32[48,1], index: 1, kind: input, shape index: {}]
  %s2 = inlined_call_operand.vmem [shape: f32[16,128], index: 2, kind: input, shape index: {}]
  %s3 = inlined_call_operand.vmem [shape: f32[48,4], index: 3, kind: input, shape index: {}]
  %s4 = inlined_call_operand.vmem [shape: f32[16,8], index: 4, kind: input, shape index: {}]
  %s5 = inlined_call_operand.hbm [shape: f32[128,128], index: 5, kind: input, shape index: {}]
  %s6 = inlined_call_operand.vmem [shape: f32[4,128], index: 6, kind: input, shape index: {}]
  %s7 = inlined_call_operand.hbm [shape: f32[128,128], index: 7, kind: input, shape index: {}]
  %s8 = inlined_call_operand.vmem [shape: f32[1,128], index: 8, kind: input, shape index: {}]
  %s9 = inlined_call_operand.vmem [shape: f32[8,128], index: 9, kind: input, shape index: {}]
  %s10 = inlined_call_operand.hbm [shape: f32[128,128], index: 10, kind: input, shape index: {}]
  %s11 = inlined_call_operand.vmem [shape: f32[1,128], index: 11, kind: input, shape index: {}]
  %s12 = inlined_call_operand.vmem [shape: f32[1,128], index: 12, kind: input, shape index: {}]
  %s13 = inlined_call_operand.hbm [shape: f32[128,128], index: 13, kind: input, shape index: {}]
  %s14 = inlined_call_operand.vmem [shape: f32[4,128], index: 14, kind: input, shape index: {}]
  %s15 = inlined_call_operand.hbm [shape: f32[128,128], index: 15, kind: input, shape index: {}]
  %s16 = inlined_call_operand.vmem [shape: f32[1,128], index: 16, kind: input, shape index: {}]
  %s17 = inlined_call_operand.vmem [shape: f32[8,128], index: 17, kind: input, shape index: {}]
  %s18 = inlined_call_operand.hbm [shape: f32[128,128], index: 18, kind: input, shape index: {}]
  %s19 = inlined_call_operand.vmem [shape: f32[1,128], index: 19, kind: input, shape index: {}]
  %s20 = inlined_call_operand.vmem [shape: f32[1,128], index: 20, kind: input, shape index: {}]
  %s21 = inlined_call_operand.hbm [shape: f32[16,128], index: 21, kind: output, shape index: {}]
  %s22 = sld [smem:[#allocation0]]
  $region118: #{tpu_custom_call.1} parent=0
    _
  %s24 = ssub.s32 1, %s22
  %s25 = scalar_select 0, %s24, %s22
  $region1: #{tpu_custom_call.1} parent=0
    #allocation2 [shape = 'u8[65536]{0}', space=vmem, size = 0x10000, scoped, tag = 'input window, operand 5, single buffered']
    #allocation3 [shape = 's32[1]{0}', space=sflag, size = 0x4, scoped, tag = 'scoped memory for tpu_custom_call.1']
    #allocation4 [shape = 's32[1]{0}', space=sflag, size = 0x4, scoped, tag = 'scoped memory for tpu_custom_call.1']
    #allocation5 [shape = 'u8[65536]{0}', space=vmem, size = 0x10000, scoped, tag = 'input window, operand 7, single buffered']
    #allocation6 [shape = 's32[1]{0}', space=sflag, size = 0x4, scoped, tag = 'scoped memory for tpu_custom_call.1']
    #allocation7 [shape = 'u8[65536]{0}', space=vmem, size = 0x10000, scoped, tag = 'input window, operand 10, single buffered']
    #allocation8 [shape = 'u8[65536]{0}', space=vmem, size = 0x10000, scoped, tag = 'input window, operand 13, single buffered']
    #allocation9 [shape = 's32[1]{0}', space=sflag, size = 0x4, scoped, tag = 'scoped memory for tpu_custom_call.1']
    #allocation10 [shape = 'u8[65536]{0}', space=vmem, size = 0x10000, scoped, tag = 'input window, operand 15, single buffered']
    #allocation11 [shape = 'u8[65536]{0}', space=vmem, size = 0x10000, scoped, tag = 'input window, operand 18, single buffered']
    #allocation12 [shape = 's32[1]{0}', space=sflag, size = 0x4, scoped, tag = 'scoped memory for tpu_custom_call.1']
    #allocation13 [shape = 'u8[8192]{0}', space=vmem, size = 0x2000, scoped, tag = 'output window, operand 0, single buffered']
    %26 = vsyncpa [#allocation3], 0
    %27 = vsyncpa [#allocation6], 0
    %28 = vsyncpa [#allocation9], 0
    %29 = vsyncpa [#allocation12], 0
    %30 = vsyncpa [#allocation4], 0
    // Predicated region
    $region2: #{tpu_custom_call.1} parent=1 // pred_check
      _
    $region3: #{tpu_custom_call.1} parent=1 // pred_check_branch
      %32 = sbr.rel (0) target = $region5
    $region4: #{tpu_custom_call.1} parent=1 // pred_region
      _
    $region5: #{tpu_custom_call.1} parent=1 // pred_fallthru
      _
    // Predicated region
    $region6: #{tpu_custom_call.1} parent=1 // pred_check
      _
    $region7: #{tpu_custom_call.1} parent=1 // pred_check_branch
      %34 = sbr.rel (0) target = $region9
    $region8: #{tpu_custom_call.1} parent=1 // pred_region
      _
    $region9: #{tpu_custom_call.1} parent=1 // pred_fallthru
      _
    // Predicated region
    $region10: #{tpu_custom_call.1} parent=1 // pred_check
      _
    $region11: #{tpu_custom_call.1} parent=1 // pred_check_branch
      %36 = sbr.rel (0) target = $region13
    $region12: #{tpu_custom_call.1} parent=1 // pred_region
      _
    $region13: #{tpu_custom_call.1} parent=1 // pred_fallthru
      _
    // Predicated region
    $region14: #{tpu_custom_call.1} parent=1 // pred_check
      _
    $region15: #{tpu_custom_call.1} parent=1 // pred_check_branch
      %38 = sbr.rel (0) target = $region17
    $region16: #{tpu_custom_call.1} parent=1 // pred_region
      _
    $region17: #{tpu_custom_call.1} parent=1 // pred_fallthru
      _
    // Predicated region
    $region18: #{tpu_custom_call.1} parent=1 // pred_check
      _
    $region19: #{tpu_custom_call.1} parent=1 // pred_check_branch
      %40 = sbr.rel (0) target = $region21
    $region20: #{tpu_custom_call.1} parent=1 // pred_region
      _
    $region21: #{tpu_custom_call.1} parent=1 // pred_fallthru
      _
    // Predicated region
    $region22: #{tpu_custom_call.1} parent=1 // pred_check
      _
    $region23: #{tpu_custom_call.1} parent=1 // pred_check_branch
      %42 = sbr.rel (0) target = $region25
    $region24: #{tpu_custom_call.1} parent=1 // pred_region
      %44 = vsyncadd [#allocation3], 0
      %s45 = sshll.u32 %s5, 4
      %s46 = int_to_ptr.hbm [resolvable:$true] %s45
      %s47 = sshll.u32 [#allocation2], 4
      %s48 = int_to_ptr.vmem [resolvable:$true] %s47
      %53 = dma.hbm_to_vmem [thread:$0]  %s46, 2048, %s48, [#allocation3], 128, 128, 8
    $region25: #{tpu_custom_call.1} parent=1 // pred_fallthru
      _
    // Predicated region
    $region26: #{tpu_custom_call.1} parent=1 // pred_check
      _
    $region27: #{tpu_custom_call.1} parent=1 // pred_check_branch
      %55 = sbr.rel (0) target = $region29
    $region28: #{tpu_custom_call.1} parent=1 // pred_region
      _
    $region29: #{tpu_custom_call.1} parent=1 // pred_fallthru
      _
    // Predicated region
    $region30: #{tpu_custom_call.1} parent=1 // pred_check
      _
    $region31: #{tpu_custom_call.1} parent=1 // pred_check_branch
      %57 = sbr.rel (0) target = $region33
    $region32: #{tpu_custom_call.1} parent=1 // pred_region
      %59 = vsyncadd [#allocation6], 0
      %s60 = sshll.u32 %s7, 4
      %s61 = int_to_ptr.hbm [resolvable:$true] %s60
      %s62 = sshll.u32 [#allocation5], 4
      %s63 = int_to_ptr.vmem [resolvable:$true] %s62
      %68 = dma.hbm_to_vmem [thread:$0]  %s61, 2048, %s63, [#allocation6], 128, 128, 8
    $region33: #{tpu_custom_call.1} parent=1 // pred_fallthru
      _
    // Predicated region
    $region34: #{tpu_custom_call.1} parent=1 // pred_check
      _
    $region35: #{tpu_custom_call.1} parent=1 // pred_check_branch
      %70 = sbr.rel (0) target = $region37
    $region36: #{tpu_custom_call.1} parent=1 // pred_region
      _
    $region37: #{tpu_custom_call.1} parent=1 // pred_fallthru
      _
    // Predicated region
    $region38: #{tpu_custom_call.1} parent=1 // pred_check
      _
    $region39: #{tpu_custom_call.1} parent=1 // pred_check_branch
      %72 = sbr.rel (0) target = $region41
    $region40: #{tpu_custom_call.1} parent=1 // pred_region
      _
    $region41: #{tpu_custom_call.1} parent=1 // pred_fallthru
      _
    // Predicated region
    $region42: #{tpu_custom_call.1} parent=1 // pred_check
      _
    $region43: #{tpu_custom_call.1} parent=1 // pred_check_branch
      %74 = sbr.rel (0) target = $region45
    $region44: #{tpu_custom_call.1} parent=1 // pred_region
      %76 = vsyncadd [#allocation6], 0
      %s77 = sshll.u32 %s10, 4
      %s78 = int_to_ptr.hbm [resolvable:$true] %s77
      %s79 = sshll.u32 [#allocation7], 4
      %s80 = int_to_ptr.vmem [resolvable:$true] %s79
      %85 = dma.hbm_to_vmem [thread:$0]  %s78, 2048, %s80, [#allocation6], 128, 128, 8
    $region45: #{tpu_custom_call.1} parent=1 // pred_fallthru
      _
    // Predicated region
    $region46: #{tpu_custom_call.1} parent=1 // pred_check
      _
    $region47: #{tpu_custom_call.1} parent=1 // pred_check_branch
      %87 = sbr.rel (0) target = $region49
    $region48: #{tpu_custom_call.1} parent=1 // pred_region
      _
    $region49: #{tpu_custom_call.1} parent=1 // pred_fallthru
      _
    // Predicated region
    $region50: #{tpu_custom_call.1} parent=1 // pred_check
      _
    $region51: #{tpu_custom_call.1} parent=1 // pred_check_branch
      %89 = sbr.rel (0) target = $region53
    $region52: #{tpu_custom_call.1} parent=1 // pred_region
      _
    $region53: #{tpu_custom_call.1} parent=1 // pred_fallthru
      _
    // Predicated region
    $region54: #{tpu_custom_call.1} parent=1 // pred_check
      _
    $region55: #{tpu_custom_call.1} parent=1 // pred_check_branch
      %91 = sbr.rel (0) target = $region57
    $region56: #{tpu_custom_call.1} parent=1 // pred_region
      %93 = vsyncadd [#allocation9], 0
      %s94 = sshll.u32 %s13, 4
      %s95 = int_to_ptr.hbm [resolvable:$true] %s94
      %s96 = sshll.u32 [#allocation8], 4
      %s97 = int_to_ptr.vmem [resolvable:$true] %s96
      %102 = dma.hbm_to_vmem [thread:$0]  %s95, 2048, %s97, [#allocation9], 128, 128, 8
    $region57: #{tpu_custom_call.1} parent=1 // pred_fallthru
      _
    // Predicated region
    $region58: #{tpu_custom_call.1} parent=1 // pred_check
      _
    $region59: #{tpu_custom_call.1} parent=1 // pred_check_branch
      %104 = sbr.rel (0) target = $region61
    $region60: #{tpu_custom_call.1} parent=1 // pred_region
      _
    $region61: #{tpu_custom_call.1} parent=1 // pred_fallthru
      _
    // Predicated region
    $region62: #{tpu_custom_call.1} parent=1 // pred_check
      _
    $region63: #{tpu_custom_call.1} parent=1 // pred_check_branch
      %106 = sbr.rel (0) target = $region65
    $region64: #{tpu_custom_call.1} parent=1 // pred_region
      %108 = vsyncadd [#allocation9], 0
      %s109 = sshll.u32 %s15, 4
      %s110 = int_to_ptr.hbm [resolvable:$true] %s109
      %s111 = sshll.u32 [#allocation10], 4
      %s112 = int_to_ptr.vmem [resolvable:$true] %s111
      %117 = dma.hbm_to_vmem [thread:$0]  %s110, 2048, %s112, [#allocation9], 128, 128, 8
    $region65: #{tpu_custom_call.1} parent=1 // pred_fallthru
      _
    // Predicated region
    $region66: #{tpu_custom_call.1} parent=1 // pred_check
      _
    $region67: #{tpu_custom_call.1} parent=1 // pred_check_branch
      %119 = sbr.rel (0) target = $region69
    $region68: #{tpu_custom_call.1} parent=1 // pred_region
      _
    $region69: #{tpu_custom_call.1} parent=1 // pred_fallthru
      _
    // Predicated region
    $region70: #{tpu_custom_call.1} parent=1 // pred_check
      _
    $region71: #{tpu_custom_call.1} parent=1 // pred_check_branch
      %121 = sbr.rel (0) target = $region73
    $region72: #{tpu_custom_call.1} parent=1 // pred_region
      _
    $region73: #{tpu_custom_call.1} parent=1 // pred_fallthru
      _
    // Predicated region
    $region74: #{tpu_custom_call.1} parent=1 // pred_check
      _
    $region75: #{tpu_custom_call.1} parent=1 // pred_check_branch
      %123 = sbr.rel (0) target = $region77
    $region76: #{tpu_custom_call.1} parent=1 // pred_region
      %125 = vsyncadd [#allocation12], 0
      %s126 = sshll.u32 %s18, 4
      %s127 = int_to_ptr.hbm [resolvable:$true] %s126
      %s128 = sshll.u32 [#allocation11], 4
      %s129 = int_to_ptr.vmem [resolvable:$true] %s128
      %134 = dma.hbm_to_vmem [thread:$0]  %s127, 2048, %s129, [#allocation12], 128, 128, 8
    $region77: #{tpu_custom_call.1} parent=1 // pred_fallthru
      _
    // Predicated region
    $region78: #{tpu_custom_call.1} parent=1 // pred_check
      _
    $region79: #{tpu_custom_call.1} parent=1 // pred_check_branch
      %136 = sbr.rel (0) target = $region81
    $region80: #{tpu_custom_call.1} parent=1 // pred_region
      _
    $region81: #{tpu_custom_call.1} parent=1 // pred_fallthru
      _
    // Predicated region
    $region82: #{tpu_custom_call.1} parent=1 // pred_check
      _
    $region83: #{tpu_custom_call.1} parent=1 // pred_check_branch
      %138 = sbr.rel (0) target = $region85
    $region84: #{tpu_custom_call.1} parent=1 // pred_region
      _
    $region85: #{tpu_custom_call.1} parent=1 // pred_fallthru
      _
    // Predicated region
    $region86: #{tpu_custom_call.1} parent=1 // pred_check
      _
    $region87: #{tpu_custom_call.1} parent=1 // pred_check_branch
      %140 = sbr.rel (0) target = $region89
    $region88: #{tpu_custom_call.1} parent=1 // pred_region
      %142 = dma.done [#allocation3], 2048
    $region89: #{tpu_custom_call.1} parent=1 // pred_fallthru
      _
    // Predicated region
    $region90: #{tpu_custom_call.1} parent=1 // pred_check
      _
    $region91: #{tpu_custom_call.1} parent=1 // pred_check_branch
      %144 = sbr.rel (0) target = $region93
    $region92: #{tpu_custom_call.1} parent=1 // pred_region
      %146 = dma.done [#allocation6], 2048
    $region93: #{tpu_custom_call.1} parent=1 // pred_fallthru
      _
    // Predicated region
    $region94: #{tpu_custom_call.1} parent=1 // pred_check
      _
    $region95: #{tpu_custom_call.1} parent=1 // pred_check_branch
      %148 = sbr.rel (0) target = $region97
    $region96: #{tpu_custom_call.1} parent=1 // pred_region
      %150 = dma.done [#allocation6], 2048
    $region97: #{tpu_custom_call.1} parent=1 // pred_fallthru
      _
    // Predicated region
    $region98: #{tpu_custom_call.1} parent=1 // pred_check
      _
    $region99: #{tpu_custom_call.1} parent=1 // pred_check_branch
      %152 = sbr.rel (0) target = $region101
    $region100: #{tpu_custom_call.1} parent=1 // pred_region
      %154 = dma.done [#allocation9], 2048
    $region101: #{tpu_custom_call.1} parent=1 // pred_fallthru
      _
    // Predicated region
    $region102: #{tpu_custom_call.1} parent=1 // pred_check
      _
    $region103: #{tpu_custom_call.1} parent=1 // pred_check_branch
      %156 = sbr.rel (0) target = $region105
    $region104: #{tpu_custom_call.1} parent=1 // pred_region
      %158 = dma.done [#allocation9], 2048
    $region105: #{tpu_custom_call.1} parent=1 // pred_fallthru
      _
    // Predicated region
    $region106: #{tpu_custom_call.1} parent=1 // pred_check
      _
    $region107: #{tpu_custom_call.1} parent=1 // pred_check_branch
      %160 = sbr.rel (0) target = $region109
    $region108: #{tpu_custom_call.1} parent=1 // pred_region
      %162 = dma.done [#allocation12], 2048
    $region109: #{tpu_custom_call.1} parent=1 // pred_fallthru
      _
    %v164 = vlaneseq
    %v165 = vand.u32 %v164, 127
    %v166 = vld [vmem:[%s0] sm:$0xff]
    %v167 = vld [vmem:[%s0 + $0x8] sm:$0xff]
    %v168 = vld [vmem:[%s0 + $0x10] sm:$0xff]
    %v169 = vld [vmem:[%s0 + $0x18] sm:$0xff]
    %v170 = vld [vmem:[%s0 + $0x20] sm:$0xff]
    %v171 = vld [vmem:[%s0 + $0x28] sm:$0xff]
    %172 = vset.pattern.permute.xlu0 0
    %173 = vperm.xlu0 %172, %v166
    %v174 = vpop.permute.xlu0 %173
    %175 = vset.pattern.permute.xlu0 0
    %176 = vperm.xlu0 %175, %v167
    %v177 = vpop.permute.xlu0 %176
    %178 = vset.pattern.permute.xlu0 0
    %179 = vperm.xlu0 %178, %v168
    %v180 = vpop.permute.xlu0 %179
    %181 = vset.pattern.permute.xlu0 0
    %182 = vperm.xlu0 %181, %v169
    %v183 = vpop.permute.xlu0 %182
    %184 = vset.pattern.permute.xlu0 0
    %185 = vperm.xlu0 %184, %v170
    %v186 = vpop.permute.xlu0 %185
    %187 = vset.pattern.permute.xlu0 0
    %188 = vperm.xlu0 %187, %v171
    %v189 = vpop.permute.xlu0 %188
    %vm190 = vcmp.eq.s32.totalorder %v174, %v165
    %vm191 = vcmp.eq.s32.totalorder %v177, %v165
    %vm192 = vcmp.eq.s32.totalorder %v180, %v165
    %vm193 = vcmp.eq.s32.totalorder %v183, %v165
    %vm194 = vcmp.eq.s32.totalorder %v186, %v165
    %vm195 = vcmp.eq.s32.totalorder %v189, %v165
    %v196 = vsel %vm190, 1, 0
    %v197 = vsel %vm191, 1, 0
    %v198 = vsel %vm192, 1, 0
    %v199 = vsel %vm193, 1, 0
    %v200 = vsel %vm194, 1, 0
    %v201 = vsel %vm195, 1, 0
    %v202 = vcvt.s32.f32 %v196
    %v203 = vcvt.s32.f32 %v197
    %v204 = vcvt.s32.f32 %v198
    %v205 = vcvt.s32.f32 %v199
    %v206 = vcvt.s32.f32 %v200
    %v207 = vcvt.s32.f32 %v201
    %v208 = vpack.c.bf16 %v203, %v202
    %v209 = vpack.c.bf16 %v205, %v204
    %v210 = vpack.c.bf16 %v207, %v206
    %v211 = vld [vmem:[%s1] sm:$0xff]
    %v212 = vld [vmem:[%s1 + $0x8] sm:$0xff]
    %v213 = vld [vmem:[%s1 + $0x10] sm:$0xff]
    %v214 = vld [vmem:[%s1 + $0x18] sm:$0xff]
    %v215 = vld [vmem:[%s1 + $0x20] sm:$0xff]
    %v216 = vld [vmem:[%s1 + $0x28] sm:$0xff]
    %217 = vset.pattern.permute.xlu0 0
    %218 = vperm.xlu0 %217, %v211
    %v219 = vpop.permute.xlu0 %218
    %220 = vset.pattern.permute.xlu0 0
    %221 = vperm.xlu0 %220, %v212
    %v222 = vpop.permute.xlu0 %221
    %223 = vset.pattern.permute.xlu0 0
    %224 = vperm.xlu0 %223, %v213
    %v225 = vpop.permute.xlu0 %224
    %226 = vset.pattern.permute.xlu0 0
    %227 = vperm.xlu0 %226, %v214
    %v228 = vpop.permute.xlu0 %227
    %229 = vset.pattern.permute.xlu0 0
    %230 = vperm.xlu0 %229, %v215
    %v231 = vpop.permute.xlu0 %230
    %232 = vset.pattern.permute.xlu0 0
    %233 = vperm.xlu0 %232, %v216
    %v234 = vpop.permute.xlu0 %233
    %vm235 = vcmp.eq.s32.totalorder %v219, %v165
    %vm236 = vcmp.eq.s32.totalorder %v222, %v165
    %vm237 = vcmp.eq.s32.totalorder %v225, %v165
    %vm238 = vcmp.eq.s32.totalorder %v228, %v165
    %vm239 = vcmp.eq.s32.totalorder %v231, %v165
    %vm240 = vcmp.eq.s32.totalorder %v234, %v165
    %v241 = vsel %vm235, 1, 0
    %v242 = vsel %vm236, 1, 0
    %v243 = vsel %vm237, 1, 0
    %v244 = vsel %vm238, 1, 0
    %v245 = vsel %vm239, 1, 0
    %v246 = vsel %vm240, 1, 0
    %v247 = vcvt.s32.f32 %v241
    %v248 = vcvt.s32.f32 %v242
    %v249 = vcvt.s32.f32 %v243
    %v250 = vcvt.s32.f32 %v244
    %v251 = vcvt.s32.f32 %v245
    %v252 = vcvt.s32.f32 %v246
    %v253 = vpack.c.bf16 %v248, %v247
    %v254 = vpack.c.bf16 %v250, %v249
    %v255 = vpack.c.bf16 %v252, %v251
    %v256 = vld [vmem:[%s3] sm:$0xff]
    %v257 = vld [vmem:[%s3 + $0x8] sm:$0xff]
    %v258 = vld [vmem:[%s3 + $0x10] sm:$0xff]
    %v259 = vld [vmem:[%s3 + $0x18] sm:$0xff]
    %v260 = vld [vmem:[%s3 + $0x20] sm:$0xff]
    %v261 = vld [vmem:[%s3 + $0x28] sm:$0xff]
    %v262 = vld [vmem:[%s4] sm:$0xff]
    %v263 = vld [vmem:[%s4 + $0x8] sm:$0xff]
    %v264 = vld [vmem:[%s2] sm:$0xff]
    %v265 = vld [vmem:[%s2 + $0x8] sm:$0xff]
    %v266 = vld [vmem:[#allocation2] sm:$0xff]
    %v267 = vld [vmem:[#allocation2 + $0x8] sm:$0xff]
    %v268 = vld [vmem:[#allocation2 + $0x10] sm:$0xff]
    %v269 = vld [vmem:[#allocation2 + $0x18] sm:$0xff]
    %v270 = vld [vmem:[#allocation2 + $0x20] sm:$0xff]
    %v271 = vld [vmem:[#allocation2 + $0x28] sm:$0xff]
    %v272 = vld [vmem:[#allocation2 + $0x30] sm:$0xff]
    %v273 = vld [vmem:[#allocation2 + $0x38] sm:$0xff]
    %v274 = vld [vmem:[#allocation2 + $0x40] sm:$0xff]
    %v275 = vld [vmem:[#allocation2 + $0x48] sm:$0xff]
    %v276 = vld [vmem:[#allocation2 + $0x50] sm:$0xff]
    %v277 = vld [vmem:[#allocation2 + $0x58] sm:$0xff]
    %v278 = vld [vmem:[#allocation2 + $0x60] sm:$0xff]
    %v279 = vld [vmem:[#allocation2 + $0x68] sm:$0xff]
    %v280 = vld [vmem:[#allocation2 + $0x70] sm:$0xff]
    %v281 = vld [vmem:[#allocation2 + $0x78] sm:$0xff]
    %v282 = vpack.c.bf16 %v265, %v264
    %v283 = vpack.c.bf16 %v267, %v266
    %v284 = vpack.c.bf16 %v269, %v268
    %v285 = vpack.c.bf16 %v271, %v270
    %v286 = vpack.c.bf16 %v273, %v272
    %v287 = vpack.c.bf16 %v275, %v274
    %v288 = vpack.c.bf16 %v277, %v276
    %v289 = vpack.c.bf16 %v279, %v278
    %v290 = vpack.c.bf16 %v281, %v280
    %291 = vmatpush.bf16.msra.mxu0 %v290
    %292 = vmatpush.bf16.msra.mxu0 %v289
    %293 = vmatpush.bf16.msra.mxu0 %v288
    %294 = vmatpush.bf16.msra.mxu0 %v287
    %295 = vmatpush.bf16.msra.mxu0 %v286
    %296 = vmatpush.bf16.msra.mxu0 %v285
    %297 = vmatpush.bf16.msra.mxu0 %v284
    %298 = vmatpush.bf16.msra.mxu0 %v283
    %299 = vmatmul.bf16.gmra.mxu0 %v282
    %v300 = vpop.f32.mrf.mxu0
    %v301 = vadd.f32 0.0, %v300
    %v302 = vpop.f32.mrf.mxu0
    %v303 = vadd.f32 0.0, %v302
    %304 = vdwg.mxu0
    %v305 = vld [vmem:[%s6] sm:$0xf]
    %vm306 = vcmask 31744
    %v308 = vsel %vm306, %v256, 0
    %v311 = vsel %vm306, %v257, 0
    %v314 = vsel %vm306, %v258, 0
    %v317 = vsel %vm306, %v259, 0
    %v320 = vsel %vm306, %v260, 0
    %v323 = vsel %vm306, %v261, 0
    %vm325 = vcmask 1043456
    %v327 = vsel %vm325, %v305, 0
    %329 = vmatpush.msra.mxu0 0.0
    %330 = vmatpush.msra.mxu0 0.0
    %331 = vmatpush.msra.mxu0 0.0
    %332 = vmatpush.msra.mxu0 0.0
    %333 = vmatpush.msra.mxu0 0.0
    %334 = vmatpush.msra.mxu0 0.0
    %335 = vmatpush.msra.mxu0 0.0
    %336 = vmatpush.msra.mxu0 0.0
    %337 = vmatpush.msra.mxu0 0.0
    %338 = vmatpush.msra.mxu0 0.0
    %339 = vmatpush.msra.mxu0 0.0
    %340 = vmatpush.msra.mxu0 0.0
    %341 = vmatpush.msra.mxu0 0.0
    %342 = vmatpush.msra.mxu0 0.0
    %343 = vmatpush.msra.mxu0 0.0
    %344 = vmatpush.msra.mxu0 %v327
    %345 = vmatmul.f32.gmra.mxu0 %v308
    %v346 = vpop.f32.mrf.mxu0
    %v347 = vadd.f32 0.0, %v346
    %348 = vmatmul.f32.gmra.mxu0 %v311
    %v349 = vpop.f32.mrf.mxu0
    %v350 = vadd.f32 0.0, %v349
    %351 = vmatmul.f32.gmra.mxu0 %v314
    %v352 = vpop.f32.mrf.mxu0
    %v353 = vadd.f32 0.0, %v352
    %354 = vmatmul.f32.gmra.mxu0 %v317
    %v355 = vpop.f32.mrf.mxu0
    %v356 = vadd.f32 0.0, %v355
    %357 = vmatmul.f32.gmra.mxu0 %v320
    %v358 = vpop.f32.mrf.mxu0
    %v359 = vadd.f32 0.0, %v358
    %360 = vmatmul.f32.gmra.mxu0 %v323
    %v361 = vpop.f32.mrf.mxu0
    %v362 = vadd.f32 0.0, %v361
    %363 = vdwg.mxu0
    %vm364 = vcmp.gt.f32.partialorder %v347, 0.0
    %vm365 = vcmp.gt.f32.partialorder %v350, 0.0
    %vm366 = vcmp.gt.f32.partialorder %v353, 0.0
    %vm367 = vcmp.gt.f32.partialorder %v356, 0.0
    %vm368 = vcmp.gt.f32.partialorder %v359, 0.0
    %vm369 = vcmp.gt.f32.partialorder %v362, 0.0
    %v370 = vmul.f32 %v347, 0.2
    %v371 = vmul.f32 %v350, 0.2
    %v372 = vmul.f32 %v353, 0.2
    %v373 = vmul.f32 %v356, 0.2
    %v374 = vmul.f32 %v359, 0.2
    %v375 = vmul.f32 %v362, 0.2
    %v376 = vsel %vm364, %v347, %v370
    %v377 = vsel %vm365, %v350, %v371
    %v378 = vsel %vm366, %v353, %v372
    %v379 = vsel %vm367, %v356, %v373
    %v380 = vsel %vm368, %v359, %v374
    %v381 = vsel %vm369, %v362, %v375
    %v382 = vld [vmem:[#allocation5] sm:$0xff]
    %v383 = vld [vmem:[#allocation5 + $0x8] sm:$0xff]
    %v384 = vld [vmem:[#allocation5 + $0x10] sm:$0xff]
    %v385 = vld [vmem:[#allocation5 + $0x18] sm:$0xff]
    %v386 = vld [vmem:[#allocation5 + $0x20] sm:$0xff]
    %v387 = vld [vmem:[#allocation5 + $0x28] sm:$0xff]
    %v388 = vld [vmem:[#allocation5 + $0x30] sm:$0xff]
    %v389 = vld [vmem:[#allocation5 + $0x38] sm:$0xff]
    %v390 = vld [vmem:[#allocation5 + $0x40] sm:$0xff]
    %v391 = vld [vmem:[#allocation5 + $0x48] sm:$0xff]
    %v392 = vld [vmem:[#allocation5 + $0x50] sm:$0xff]
    %v393 = vld [vmem:[#allocation5 + $0x58] sm:$0xff]
    %v394 = vld [vmem:[#allocation5 + $0x60] sm:$0xff]
    %v395 = vld [vmem:[#allocation5 + $0x68] sm:$0xff]
    %v396 = vld [vmem:[#allocation5 + $0x70] sm:$0xff]
    %v397 = vld [vmem:[#allocation5 + $0x78] sm:$0xff]
    %v398 = vld [vmem:[%s8] sm:$0x1]
    %v400 = vperm.slane %v398, 0
    %402 = vmatpush.msra.mxu0 %v397
    %403 = vmatpush.msra.mxu0 %v396
    %404 = vmatpush.msra.mxu0 %v395
    %405 = vmatpush.msra.mxu0 %v394
    %406 = vmatpush.msra.mxu0 %v393
    %407 = vmatpush.msra.mxu0 %v392
    %408 = vmatpush.msra.mxu0 %v391
    %409 = vmatpush.msra.mxu0 %v390
    %410 = vmatpush.msra.mxu0 %v389
    %411 = vmatpush.msra.mxu0 %v388
    %412 = vmatpush.msra.mxu0 %v387
    %413 = vmatpush.msra.mxu0 %v386
    %414 = vmatpush.msra.mxu0 %v385
    %415 = vmatpush.msra.mxu0 %v384
    %416 = vmatpush.msra.mxu0 %v383
    %417 = vmatpush.msra.mxu0 %v382
    %418 = vmatmul.f32.gmra.mxu0 %v376
    %v419 = vpop.f32.mrf.mxu0
    %v420 = vadd.f32 %v400, %v419
    %421 = vmatmul.f32.gmra.mxu0 %v377
    %v422 = vpop.f32.mrf.mxu0
    %v423 = vadd.f32 %v400, %v422
    %424 = vmatmul.f32.gmra.mxu0 %v378
    %v425 = vpop.f32.mrf.mxu0
    %v426 = vadd.f32 %v400, %v425
    %427 = vmatmul.f32.gmra.mxu0 %v379
    %v428 = vpop.f32.mrf.mxu0
    %v429 = vadd.f32 %v400, %v428
    %430 = vmatmul.f32.gmra.mxu0 %v380
    %v431 = vpop.f32.mrf.mxu0
    %v432 = vadd.f32 %v400, %v431
    %433 = vmatmul.f32.gmra.mxu0 %v381
    %v434 = vpop.f32.mrf.mxu0
    %v435 = vadd.f32 %v400, %v434
    %436 = vdwg.mxu0
    %v437 = vmax.f32 %v420, %v432
    %v438 = vmax.f32 %v423, %v435
    %v439 = vmax.f32 %v437, %v438
    %v440 = vmax.f32 %v426, %v429
    %v441 = vmax.f32 %v439, %v440
    %v442 = vrot.slane %v441, 4
    %v443 = vmax.f32 %v441, %v442
    %v444 = vrot.slane %v443, 2
    %v445 = vmax.f32 %v443, %v444
    %v446 = vrot.slane %v445, 1
    %v447 = vmax.f32 %v445, %v446
    %v448 = vsub.f32 %v420, %v447
    %v449 = vsub.f32 %v423, %v447
    %v450 = vsub.f32 %v426, %v447
    %v451 = vsub.f32 %v429, %v447
    %v452 = vsub.f32 %v432, %v447
    %v453 = vsub.f32 %v435, %v447
    %v454 = vmul.f32 %v448, 1.442695
    %v455 = vpow.pop %v454
    %v456 = vmul.f32 %v449, 1.442695
    %v457 = vpow.pop %v456
    %v458 = vmul.f32 %v450, 1.442695
    %v459 = vpow.pop %v458
    %v460 = vmul.f32 %v451, 1.442695
    %v461 = vpow.pop %v460
    %v462 = vmul.f32 %v452, 1.442695
    %v463 = vpow.pop %v462
    %v464 = vmul.f32 %v453, 1.442695
    %v465 = vpow.pop %v464
    %v466 = vpack.c.bf16 %v457, %v455
    %v467 = vpack.c.bf16 %v461, %v459
    %v468 = vpack.c.bf16 %v465, %v463
    %469 = vxpose.xlu0.c.b16.start [1/8] %v208, 128
    %470 = vxpose.xlu0.c.b16.cont [2/8] %v209, 128
    %471 = vxpose.xlu0.c.b16.cont [3/8] %v210, 128
    %472 = vxpose.xlu0.c.b16.cont [4/8] 0, 128
    %473 = vxpose.xlu0.c.b16.cont [5/8] 0, 128
    %474 = vxpose.xlu0.c.b16.cont [6/8] 0, 128
    %475 = vxpose.xlu0.c.b16.cont [7/8] 0, 128
    %476 = vxpose.xlu0.c.b16.end [8/8] 0, 128
    %v477 = vpop.trf.xlu0
    %v478 = vpop.trf.xlu0
    %v479 = vpop.trf.xlu0
    %v480 = vpop.trf.xlu0
    %v481 = vpop.trf.xlu0
    %v482 = vpop.trf.xlu0
    %v483 = vpop.trf.xlu0
    %v484 = vpop.trf.xlu0
    %vm485 = vcmask 392192
    %v487 = vsel %vm485, %v477, 0
    %489 = vmatpush.bf16.msra.mxu0 0
    %490 = vmatpush.bf16.msra.mxu0 0
    %491 = vmatpush.bf16.msra.mxu0 0
    %492 = vmatpush.bf16.msra.mxu0 0
    %493 = vmatpush.bf16.msra.mxu0 0
    %494 = vmatpush.bf16.msra.mxu0 %v468
    %495 = vmatpush.bf16.msra.mxu0 %v467
    %496 = vmatpush.bf16.msra.mxu0 %v466
    %497 = vmatmul.bf16.gmra.mxu0 %v487
    %v498 = vpop.f32.mrf.mxu0
    %v499 = vadd.f32 0.0, %v498
    %v500 = vpop.f32.mrf.mxu0
    %v501 = vadd.f32 0.0, %v500
    %502 = vdwg.mxu0
    %v503 = vpack.c.bf16 %v501, %v499
    %vm504 = vcmask 130048
    %v506 = vsel %vm504, %v208, 0
    %v509 = vsel %vm504, %v209, 0
    %v512 = vsel %vm504, %v210, 0
    %514 = vmatpush.bf16.msra.mxu0 0
    %515 = vmatpush.bf16.msra.mxu0 0
    %516 = vmatpush.bf16.msra.mxu0 0
    %517 = vmatpush.bf16.msra.mxu0 0
    %518 = vmatpush.bf16.msra.mxu0 0
    %519 = vmatpush.bf16.msra.mxu0 0
    %520 = vmatpush.bf16.msra.mxu0 0
    %521 = vmatpush.bf16.msra.mxu0 %v503
    %522 = vmatmul.bf16.gmra.mxu0 %v506
    %v523 = vpop.f32.mrf.mxu0
    %v524 = vadd.f32 1e-16, %v523
    %v525 = vpop.f32.mrf.mxu0
    %v526 = vadd.f32 1e-16, %v525
    %527 = vmatmul.bf16.gmra.mxu0 %v509
    %v528 = vpop.f32.mrf.mxu0
    %v529 = vadd.f32 1e-16, %v528
    %v530 = vpop.f32.mrf.mxu0
    %v531 = vadd.f32 1e-16, %v530
    %532 = vmatmul.bf16.gmra.mxu0 %v512
    %v533 = vpop.f32.mrf.mxu0
    %v534 = vadd.f32 1e-16, %v533
    %v535 = vpop.f32.mrf.mxu0
    %v536 = vadd.f32 1e-16, %v535
    %537 = vdwg.mxu0
    %v538 = vrcp.pop %v524
    %v539 = vrcp.pop %v526
    %v540 = vrcp.pop %v529
    %v541 = vrcp.pop %v531
    %v542 = vrcp.pop %v534
    %v543 = vrcp.pop %v536
    %v544 = vmul.f32 %v455, %v538
    %v545 = vmul.f32 %v457, %v539
    %v546 = vmul.f32 %v459, %v540
    %v547 = vmul.f32 %v461, %v541
    %v548 = vmul.f32 %v463, %v542
    %v549 = vmul.f32 %v465, %v543
    %v550 = vpack.c.bf16 %v303, %v301
    %551 = vmatpush.bf16.msra.mxu0 0
    %552 = vmatpush.bf16.msra.mxu0 0
    %553 = vmatpush.bf16.msra.mxu0 0
    %554 = vmatpush.bf16.msra.mxu0 0
    %555 = vmatpush.bf16.msra.mxu0 0
    %556 = vmatpush.bf16.msra.mxu0 0
    %557 = vmatpush.bf16.msra.mxu0 0
    %558 = vmatpush.bf16.msra.mxu0 %v550
    %559 = vmatmul.bf16.gmra.mxu0 %v506
    %v560 = vpop.f32.mrf.mxu0
    %v561 = vadd.f32 0.0, %v560
    %v562 = vpop.f32.mrf.mxu0
    %v563 = vadd.f32 0.0, %v562
    %564 = vmatmul.bf16.gmra.mxu0 %v509
    %v565 = vpop.f32.mrf.mxu0
    %v566 = vadd.f32 0.0, %v565
    %v567 = vpop.f32.mrf.mxu0
    %v568 = vadd.f32 0.0, %v567
    %569 = vmatmul.bf16.gmra.mxu0 %v512
    %v570 = vpop.f32.mrf.mxu0
    %v571 = vadd.f32 0.0, %v570
    %v572 = vpop.f32.mrf.mxu0
    %v573 = vadd.f32 0.0, %v572
    %574 = vdwg.mxu0
    %v575 = vmul.f32 %v544, %v561
    %v576 = vmul.f32 %v545, %v563
    %v577 = vmul.f32 %v546, %v566
    %v578 = vmul.f32 %v547, %v568
    %v579 = vmul.f32 %v548, %v571
    %v580 = vmul.f32 %v549, %v573
    %v581 = vpack.c.bf16 %v576, %v575
    %v582 = vpack.c.bf16 %v578, %v577
    %v583 = vpack.c.bf16 %v580, %v579
    %v584 = vld [vmem:[%s9] sm:$0xff]
    %vm585 = vcmask 64512
    %v587 = vsel %vm585, %v262, 0
    %v590 = vsel %vm585, %v263, 0
    %592 = vmatpush.msra.mxu0 0.0
    %593 = vmatpush.msra.mxu0 0.0
    %594 = vmatpush.msra.mxu0 0.0
    %595 = vmatpush.msra.mxu0 0.0
    %596 = vmatpush.msra.mxu0 0.0
    %597 = vmatpush.msra.mxu0 0.0
    %598 = vmatpush.msra.mxu0 0.0
    %599 = vmatpush.msra.mxu0 0.0
    %600 = vmatpush.msra.mxu0 0.0
    %601 = vmatpush.msra.mxu0 0.0
    %602 = vmatpush.msra.mxu0 0.0
    %603 = vmatpush.msra.mxu0 0.0
    %604 = vmatpush.msra.mxu0 0.0
    %605 = vmatpush.msra.mxu0 0.0
    %606 = vmatpush.msra.mxu0 0.0
    %607 = vmatpush.msra.mxu0 %v584
    %608 = vmatmul.f32.gmra.mxu0 %v587
    %v609 = vpop.f32.mrf.mxu0
    %v610 = vadd.f32 0.0, %v609
    %611 = vmatmul.f32.gmra.mxu0 %v590
    %v612 = vpop.f32.mrf.mxu0
    %v613 = vadd.f32 0.0, %v612
    %614 = vdwg.mxu0
    %vm615 = vcmp.gt.f32.partialorder %v610, 0.0
    %vm616 = vcmp.gt.f32.partialorder %v613, 0.0
    %v617 = vmul.f32 %v610, 0.2
    %v618 = vmul.f32 %v613, 0.2
    %v619 = vsel %vm615, %v610, %v617
    %v620 = vsel %vm616, %v613, %v618
    %v621 = vld [vmem:[#allocation7] sm:$0xff]
    %v622 = vld [vmem:[#allocation7 + $0x8] sm:$0xff]
    %v623 = vld [vmem:[#allocation7 + $0x10] sm:$0xff]
    %v624 = vld [vmem:[#allocation7 + $0x18] sm:$0xff]
    %v625 = vld [vmem:[#allocation7 + $0x20] sm:$0xff]
    %v626 = vld [vmem:[#allocation7 + $0x28] sm:$0xff]
    %v627 = vld [vmem:[#allocation7 + $0x30] sm:$0xff]
    %v628 = vld [vmem:[#allocation7 + $0x38] sm:$0xff]
    %v629 = vld [vmem:[#allocation7 + $0x40] sm:$0xff]
    %v630 = vld [vmem:[#allocation7 + $0x48] sm:$0xff]
    %v631 = vld [vmem:[#allocation7 + $0x50] sm:$0xff]
    %v632 = vld [vmem:[#allocation7 + $0x58] sm:$0xff]
    %v633 = vld [vmem:[#allocation7 + $0x60] sm:$0xff]
    %v634 = vld [vmem:[#allocation7 + $0x68] sm:$0xff]
    %v635 = vld [vmem:[#allocation7 + $0x70] sm:$0xff]
    %v636 = vld [vmem:[#allocation7 + $0x78] sm:$0xff]
    %v637 = vld [vmem:[%s11] sm:$0x1]
    %v639 = vperm.slane %v637, 0
    %641 = vmatpush.msra.mxu0 %v636
    %642 = vmatpush.msra.mxu0 %v635
    %643 = vmatpush.msra.mxu0 %v634
    %644 = vmatpush.msra.mxu0 %v633
    %645 = vmatpush.msra.mxu0 %v632
    %646 = vmatpush.msra.mxu0 %v631
    %647 = vmatpush.msra.mxu0 %v630
    %648 = vmatpush.msra.mxu0 %v629
    %649 = vmatpush.msra.mxu0 %v628
    %650 = vmatpush.msra.mxu0 %v627
    %651 = vmatpush.msra.mxu0 %v626
    %652 = vmatpush.msra.mxu0 %v625
    %653 = vmatpush.msra.mxu0 %v624
    %654 = vmatpush.msra.mxu0 %v623
    %655 = vmatpush.msra.mxu0 %v622
    %656 = vmatpush.msra.mxu0 %v621
    %657 = vmatmul.f32.gmra.mxu0 %v619
    %v658 = vpop.f32.mrf.mxu0
    %v659 = vadd.f32 %v639, %v658
    %660 = vmatmul.f32.gmra.mxu0 %v620
    %v661 = vpop.f32.mrf.mxu0
    %v662 = vadd.f32 %v639, %v661
    %663 = vdwg.mxu0
    %vm664 = vcmp.gt.f32.partialorder %v659, 0.0
    %vm665 = vcmp.gt.f32.partialorder %v662, 0.0
    %v666 = vmul.f32 %v659, 0.01
    %v667 = vmul.f32 %v662, 0.01
    %v668 = vsel %vm664, %v659, %v666
    %v669 = vsel %vm665, %v662, %v667
    %v670 = vld [vmem:[%s12] sm:$0x1]
    %v672 = vperm.slane %v670, 0
    %674 = vxpose.xlu0.c.b16.start [1/8] %v253, 128
    %675 = vxpose.xlu0.c.b16.cont [2/8] %v254, 128
    %676 = vxpose.xlu0.c.b16.cont [3/8] %v255, 128
    %677 = vxpose.xlu0.c.b16.cont [4/8] 0, 128
    %678 = vxpose.xlu0.c.b16.cont [5/8] 0, 128
    %679 = vxpose.xlu0.c.b16.cont [6/8] 0, 128
    %680 = vxpose.xlu0.c.b16.cont [7/8] 0, 128
    %681 = vxpose.xlu0.c.b16.end [8/8] 0, 128
    %v682 = vpop.trf.xlu0
    %v683 = vpop.trf.xlu0
    %v684 = vpop.trf.xlu0
    %v685 = vpop.trf.xlu0
    %v686 = vpop.trf.xlu0
    %v687 = vpop.trf.xlu0
    %v688 = vpop.trf.xlu0
    %v689 = vpop.trf.xlu0
    %v691 = vsel %vm485, %v682, 0
    %693 = vmatpush.bf16.msra.mxu0 0
    %694 = vmatpush.bf16.msra.mxu0 0
    %695 = vmatpush.bf16.msra.mxu0 0
    %696 = vmatpush.bf16.msra.mxu0 0
    %697 = vmatpush.bf16.msra.mxu0 0
    %698 = vmatpush.bf16.msra.mxu0 %v583
    %699 = vmatpush.bf16.msra.mxu0 %v582
    %700 = vmatpush.bf16.msra.mxu0 %v581
    %701 = vmatmul.bf16.gmra.mxu0 %v691
    %v702 = vpop.f32.mrf.mxu0
    %v703 = vadd.f32 %v672, %v702
    %v704 = vpop.f32.mrf.mxu0
    %v705 = vadd.f32 %v672, %v704
    %706 = vdwg.mxu0
    %v707 = vmul.f32 %v668, 0.5
    %v708 = vmul.f32 %v669, 0.5
    %v709 = vadd.f32 %v703, %v707
    %v710 = vadd.f32 %v705, %v708
    %vm711 = vcmp.gt.f32.partialorder %v709, 0.0
    %vm712 = vcmp.gt.f32.partialorder %v710, 0.0
    %v713 = vmul.f32 %v709, 1.442695
    %v714 = vpow.pop %v713
    %v715 = vmul.f32 %v710, 1.442695
    %v716 = vpow.pop %v715
    %v717 = vsub.f32 %v714, 1.0
    %v718 = vsub.f32 %v716, 1.0
    %v719 = vsel %vm711, %v709, %v717
    %v720 = vsel %vm712, %v710, %v718
    %v721 = vld [vmem:[#allocation8] sm:$0xff]
    %v722 = vld [vmem:[#allocation8 + $0x8] sm:$0xff]
    %v723 = vld [vmem:[#allocation8 + $0x10] sm:$0xff]
    %v724 = vld [vmem:[#allocation8 + $0x18] sm:$0xff]
    %v725 = vld [vmem:[#allocation8 + $0x20] sm:$0xff]
    %v726 = vld [vmem:[#allocation8 + $0x28] sm:$0xff]
    %v727 = vld [vmem:[#allocation8 + $0x30] sm:$0xff]
    %v728 = vld [vmem:[#allocation8 + $0x38] sm:$0xff]
    %v729 = vld [vmem:[#allocation8 + $0x40] sm:$0xff]
    %v730 = vld [vmem:[#allocation8 + $0x48] sm:$0xff]
    %v731 = vld [vmem:[#allocation8 + $0x50] sm:$0xff]
    %v732 = vld [vmem:[#allocation8 + $0x58] sm:$0xff]
    %v733 = vld [vmem:[#allocation8 + $0x60] sm:$0xff]
    %v734 = vld [vmem:[#allocation8 + $0x68] sm:$0xff]
    %v735 = vld [vmem:[#allocation8 + $0x70] sm:$0xff]
    %v736 = vld [vmem:[#allocation8 + $0x78] sm:$0xff]
    %v737 = vpack.c.bf16 %v720, %v719
    %v738 = vpack.c.bf16 %v722, %v721
    %v739 = vpack.c.bf16 %v724, %v723
    %v740 = vpack.c.bf16 %v726, %v725
    %v741 = vpack.c.bf16 %v728, %v727
    %v742 = vpack.c.bf16 %v730, %v729
    %v743 = vpack.c.bf16 %v732, %v731
    %v744 = vpack.c.bf16 %v734, %v733
    %v745 = vpack.c.bf16 %v736, %v735
    %746 = vmatpush.bf16.msra.mxu0 %v745
    %747 = vmatpush.bf16.msra.mxu0 %v744
    %748 = vmatpush.bf16.msra.mxu0 %v743
    %749 = vmatpush.bf16.msra.mxu0 %v742
    %750 = vmatpush.bf16.msra.mxu0 %v741
    %751 = vmatpush.bf16.msra.mxu0 %v740
    %752 = vmatpush.bf16.msra.mxu0 %v739
    %753 = vmatpush.bf16.msra.mxu0 %v738
    %754 = vmatmul.bf16.gmra.mxu0 %v737
    %v755 = vpop.f32.mrf.mxu0
    %v756 = vadd.f32 0.0, %v755
    %v757 = vpop.f32.mrf.mxu0
    %v758 = vadd.f32 0.0, %v757
    %759 = vdwg.mxu0
    %v760 = vld [vmem:[%s14] sm:$0xf]
    %v762 = vsel %vm325, %v760, 0
    %764 = vmatpush.msra.mxu0 0.0
    %765 = vmatpush.msra.mxu0 0.0
    %766 = vmatpush.msra.mxu0 0.0
    %767 = vmatpush.msra.mxu0 0.0
    %768 = vmatpush.msra.mxu0 0.0
    %769 = vmatpush.msra.mxu0 0.0
    %770 = vmatpush.msra.mxu0 0.0
    %771 = vmatpush.msra.mxu0 0.0
    %772 = vmatpush.msra.mxu0 0.0
    %773 = vmatpush.msra.mxu0 0.0
    %774 = vmatpush.msra.mxu0 0.0
    %775 = vmatpush.msra.mxu0 0.0
    %776 = vmatpush.msra.mxu0 0.0
    %777 = vmatpush.msra.mxu0 0.0
    %778 = vmatpush.msra.mxu0 0.0
    %779 = vmatpush.msra.mxu0 %v762
    %780 = vmatmul.f32.gmra.mxu0 %v308
    %v781 = vpop.f32.mrf.mxu0
    %v782 = vadd.f32 0.0, %v781
    %783 = vmatmul.f32.gmra.mxu0 %v311
    %v784 = vpop.f32.mrf.mxu0
    %v785 = vadd.f32 0.0, %v784
    %786 = vmatmul.f32.gmra.mxu0 %v314
    %v787 = vpop.f32.mrf.mxu0
    %v788 = vadd.f32 0.0, %v787
    %789 = vmatmul.f32.gmra.mxu0 %v317
    %v790 = vpop.f32.mrf.mxu0
    %v791 = vadd.f32 0.0, %v790
    %792 = vmatmul.f32.gmra.mxu0 %v320
    %v793 = vpop.f32.mrf.mxu0
    %v794 = vadd.f32 0.0, %v793
    %795 = vmatmul.f32.gmra.mxu0 %v323
    %v796 = vpop.f32.mrf.mxu0
    %v797 = vadd.f32 0.0, %v796
    %798 = vdwg.mxu0
    %vm799 = vcmp.gt.f32.partialorder %v782, 0.0
    %vm800 = vcmp.gt.f32.partialorder %v785, 0.0
    %vm801 = vcmp.gt.f32.partialorder %v788, 0.0
    %vm802 = vcmp.gt.f32.partialorder %v791, 0.0
    %vm803 = vcmp.gt.f32.partialorder %v794, 0.0
    %vm804 = vcmp.gt.f32.partialorder %v797, 0.0
    %v805 = vmul.f32 %v782, 0.2
    %v806 = vmul.f32 %v785, 0.2
    %v807 = vmul.f32 %v788, 0.2
    %v808 = vmul.f32 %v791, 0.2
    %v809 = vmul.f32 %v794, 0.2
    %v810 = vmul.f32 %v797, 0.2
    %v811 = vsel %vm799, %v782, %v805
    %v812 = vsel %vm800, %v785, %v806
    %v813 = vsel %vm801, %v788, %v807
    %v814 = vsel %vm802, %v791, %v808
    %v815 = vsel %vm803, %v794, %v809
    %v816 = vsel %vm804, %v797, %v810
    %v817 = vld [vmem:[#allocation10] sm:$0xff]
    %v818 = vld [vmem:[#allocation10 + $0x8] sm:$0xff]
    %v819 = vld [vmem:[#allocation10 + $0x10] sm:$0xff]
    %v820 = vld [vmem:[#allocation10 + $0x18] sm:$0xff]
    %v821 = vld [vmem:[#allocation10 + $0x20] sm:$0xff]
    %v822 = vld [vmem:[#allocation10 + $0x28] sm:$0xff]
    %v823 = vld [vmem:[#allocation10 + $0x30] sm:$0xff]
    %v824 = vld [vmem:[#allocation10 + $0x38] sm:$0xff]
    %v825 = vld [vmem:[#allocation10 + $0x40] sm:$0xff]
    %v826 = vld [vmem:[#allocation10 + $0x48] sm:$0xff]
    %v827 = vld [vmem:[#allocation10 + $0x50] sm:$0xff]
    %v828 = vld [vmem:[#allocation10 + $0x58] sm:$0xff]
    %v829 = vld [vmem:[#allocation10 + $0x60] sm:$0xff]
    %v830 = vld [vmem:[#allocation10 + $0x68] sm:$0xff]
    %v831 = vld [vmem:[#allocation10 + $0x70] sm:$0xff]
    %v832 = vld [vmem:[#allocation10 + $0x78] sm:$0xff]
    %v833 = vld [vmem:[%s16] sm:$0x1]
    %v835 = vperm.slane %v833, 0
    %837 = vmatpush.msra.mxu0 %v832
    %838 = vmatpush.msra.mxu0 %v831
    %839 = vmatpush.msra.mxu0 %v830
    %840 = vmatpush.msra.mxu0 %v829
    %841 = vmatpush.msra.mxu0 %v828
    %842 = vmatpush.msra.mxu0 %v827
    %843 = vmatpush.msra.mxu0 %v826
    %844 = vmatpush.msra.mxu0 %v825
    %845 = vmatpush.msra.mxu0 %v824
    %846 = vmatpush.msra.mxu0 %v823
    %847 = vmatpush.msra.mxu0 %v822
    %848 = vmatpush.msra.mxu0 %v821
    %849 = vmatpush.msra.mxu0 %v820
    %850 = vmatpush.msra.mxu0 %v819
    %851 = vmatpush.msra.mxu0 %v818
    %852 = vmatpush.msra.mxu0 %v817
    %853 = vmatmul.f32.gmra.mxu0 %v811
    %v854 = vpop.f32.mrf.mxu0
    %v855 = vadd.f32 %v835, %v854
    %856 = vmatmul.f32.gmra.mxu0 %v812
    %v857 = vpop.f32.mrf.mxu0
    %v858 = vadd.f32 %v835, %v857
    %859 = vmatmul.f32.gmra.mxu0 %v813
    %v860 = vpop.f32.mrf.mxu0
    %v861 = vadd.f32 %v835, %v860
    %862 = vmatmul.f32.gmra.mxu0 %v814
    %v863 = vpop.f32.mrf.mxu0
    %v864 = vadd.f32 %v835, %v863
    %865 = vmatmul.f32.gmra.mxu0 %v815
    %v866 = vpop.f32.mrf.mxu0
    %v867 = vadd.f32 %v835, %v866
    %868 = vmatmul.f32.gmra.mxu0 %v816
    %v869 = vpop.f32.mrf.mxu0
    %v870 = vadd.f32 %v835, %v869
    %871 = vdwg.mxu0
    %v872 = vmax.f32 %v855, %v867
    %v873 = vmax.f32 %v858, %v870
    %v874 = vmax.f32 %v872, %v873
    %v875 = vmax.f32 %v861, %v864
    %v876 = vmax.f32 %v874, %v875
    %v877 = vrot.slane %v876, 4
    %v878 = vmax.f32 %v876, %v877
    %v879 = vrot.slane %v878, 2
    %v880 = vmax.f32 %v878, %v879
    %v881 = vrot.slane %v880, 1
    %v882 = vmax.f32 %v880, %v881
    %v883 = vsub.f32 %v855, %v882
    %v884 = vsub.f32 %v858, %v882
    %v885 = vsub.f32 %v861, %v882
    %v886 = vsub.f32 %v864, %v882
    %v887 = vsub.f32 %v867, %v882
    %v888 = vsub.f32 %v870, %v882
    %v889 = vmul.f32 %v883, 1.442695
    %v890 = vpow.pop %v889
    %v891 = vmul.f32 %v884, 1.442695
    %v892 = vpow.pop %v891
    %v893 = vmul.f32 %v885, 1.442695
    %v894 = vpow.pop %v893
    %v895 = vmul.f32 %v886, 1.442695
    %v896 = vpow.pop %v895
    %v897 = vmul.f32 %v887, 1.442695
    %v898 = vpow.pop %v897
    %v899 = vmul.f32 %v888, 1.442695
    %v900 = vpow.pop %v899
    %v901 = vpack.c.bf16 %v892, %v890
    %v902 = vpack.c.bf16 %v896, %v894
    %v903 = vpack.c.bf16 %v900, %v898
    %904 = vmatpush.bf16.msra.mxu0 0
    %905 = vmatpush.bf16.msra.mxu0 0
    %906 = vmatpush.bf16.msra.mxu0 0
    %907 = vmatpush.bf16.msra.mxu0 0
    %908 = vmatpush.bf16.msra.mxu0 0
    %909 = vmatpush.bf16.msra.mxu0 %v903
    %910 = vmatpush.bf16.msra.mxu0 %v902
    %911 = vmatpush.bf16.msra.mxu0 %v901
    %912 = vmatmul.bf16.gmra.mxu0 %v487
    %v913 = vpop.f32.mrf.mxu0
    %v914 = vadd.f32 0.0, %v913
    %v915 = vpop.f32.mrf.mxu0
    %v916 = vadd.f32 0.0, %v915
    %917 = vdwg.mxu0
    %v918 = vpack.c.bf16 %v916, %v914
    %919 = vmatpush.bf16.msra.mxu0 0
    %920 = vmatpush.bf16.msra.mxu0 0
    %921 = vmatpush.bf16.msra.mxu0 0
    %922 = vmatpush.bf16.msra.mxu0 0
    %923 = vmatpush.bf16.msra.mxu0 0
    %924 = vmatpush.bf16.msra.mxu0 0
    %925 = vmatpush.bf16.msra.mxu0 0
    %926 = vmatpush.bf16.msra.mxu0 %v918
    %927 = vmatmul.bf16.gmra.mxu0 %v506
    %v928 = vpop.f32.mrf.mxu0
    %v929 = vadd.f32 1e-16, %v928
    %v930 = vpop.f32.mrf.mxu0
    %v931 = vadd.f32 1e-16, %v930
    %932 = vmatmul.bf16.gmra.mxu0 %v509
    %v933 = vpop.f32.mrf.mxu0
    %v934 = vadd.f32 1e-16, %v933
    %v935 = vpop.f32.mrf.mxu0
    %v936 = vadd.f32 1e-16, %v935
    %937 = vmatmul.bf16.gmra.mxu0 %v512
    %v938 = vpop.f32.mrf.mxu0
    %v939 = vadd.f32 1e-16, %v938
    %v940 = vpop.f32.mrf.mxu0
    %v941 = vadd.f32 1e-16, %v940
    %942 = vdwg.mxu0
    %v943 = vrcp.pop %v929
    %v944 = vrcp.pop %v931
    %v945 = vrcp.pop %v934
    %v946 = vrcp.pop %v936
    %v947 = vrcp.pop %v939
    %v948 = vrcp.pop %v941
    %v949 = vmul.f32 %v890, %v943
    %v950 = vmul.f32 %v892, %v944
    %v951 = vmul.f32 %v894, %v945
    %v952 = vmul.f32 %v896, %v946
    %v953 = vmul.f32 %v898, %v947
    %v954 = vmul.f32 %v900, %v948
    %v955 = vpack.c.bf16 %v758, %v756
    %956 = vmatpush.bf16.msra.mxu0 0
    %957 = vmatpush.bf16.msra.mxu0 0
    %958 = vmatpush.bf16.msra.mxu0 0
    %959 = vmatpush.bf16.msra.mxu0 0
    %960 = vmatpush.bf16.msra.mxu0 0
    %961 = vmatpush.bf16.msra.mxu0 0
    %962 = vmatpush.bf16.msra.mxu0 0
    %963 = vmatpush.bf16.msra.mxu0 %v955
    %964 = vmatmul.bf16.gmra.mxu0 %v506
    %v965 = vpop.f32.mrf.mxu0
    %v966 = vadd.f32 0.0, %v965
    %v967 = vpop.f32.mrf.mxu0
    %v968 = vadd.f32 0.0, %v967
    %969 = vmatmul.bf16.gmra.mxu0 %v509
    %v970 = vpop.f32.mrf.mxu0
    %v971 = vadd.f32 0.0, %v970
    %v972 = vpop.f32.mrf.mxu0
    %v973 = vadd.f32 0.0, %v972
    %974 = vmatmul.bf16.gmra.mxu0 %v512
    %v975 = vpop.f32.mrf.mxu0
    %v976 = vadd.f32 0.0, %v975
    %v977 = vpop.f32.mrf.mxu0
    %v978 = vadd.f32 0.0, %v977
    %979 = vdwg.mxu0
    %v980 = vmul.f32 %v949, %v966
    %v981 = vmul.f32 %v950, %v968
    %v982 = vmul.f32 %v951, %v971
    %v983 = vmul.f32 %v952, %v973
    %v984 = vmul.f32 %v953, %v976
    %v985 = vmul.f32 %v954, %v978
    %v986 = vpack.c.bf16 %v981, %v980
    %v987 = vpack.c.bf16 %v983, %v982
    %v988 = vpack.c.bf16 %v985, %v984
    %v989 = vld [vmem:[%s17] sm:$0xff]
    %990 = vmatpush.msra.mxu0 0.0
    %991 = vmatpush.msra.mxu0 0.0
    %992 = vmatpush.msra.mxu0 0.0
    %993 = vmatpush.msra.mxu0 0.0
    %994 = vmatpush.msra.mxu0 0.0
    %995 = vmatpush.msra.mxu0 0.0
    %996 = vmatpush.msra.mxu0 0.0
    %997 = vmatpush.msra.mxu0 0.0
    %998 = vmatpush.msra.mxu0 0.0
    %999 = vmatpush.msra.mxu0 0.0
    %1000 = vmatpush.msra.mxu0 0.0
    %1001 = vmatpush.msra.mxu0 0.0
    %1002 = vmatpush.msra.mxu0 0.0
    %1003 = vmatpush.msra.mxu0 0.0
    %1004 = vmatpush.msra.mxu0 0.0
    %1005 = vmatpush.msra.mxu0 %v989
    %1006 = vmatmul.f32.gmra.mxu0 %v587
    %v1007 = vpop.f32.mrf.mxu0
    %v1008 = vadd.f32 0.0, %v1007
    %1009 = vmatmul.f32.gmra.mxu0 %v590
    %v1010 = vpop.f32.mrf.mxu0
    %v1011 = vadd.f32 0.0, %v1010
    %1012 = vdwg.mxu0
    %vm1013 = vcmp.gt.f32.partialorder %v1008, 0.0
    %vm1014 = vcmp.gt.f32.partialorder %v1011, 0.0
    %v1015 = vmul.f32 %v1008, 0.2
    %v1016 = vmul.f32 %v1011, 0.2
    %v1017 = vsel %vm1013, %v1008, %v1015
    %v1018 = vsel %vm1014, %v1011, %v1016
    %v1019 = vld [vmem:[#allocation11] sm:$0xff]
    %v1020 = vld [vmem:[#allocation11 + $0x8] sm:$0xff]
    %v1021 = vld [vmem:[#allocation11 + $0x10] sm:$0xff]
    %v1022 = vld [vmem:[#allocation11 + $0x18] sm:$0xff]
    %v1023 = vld [vmem:[#allocation11 + $0x20] sm:$0xff]
    %v1024 = vld [vmem:[#allocation11 + $0x28] sm:$0xff]
    %v1025 = vld [vmem:[#allocation11 + $0x30] sm:$0xff]
    %v1026 = vld [vmem:[#allocation11 + $0x38] sm:$0xff]
    %v1027 = vld [vmem:[#allocation11 + $0x40] sm:$0xff]
    %v1028 = vld [vmem:[#allocation11 + $0x48] sm:$0xff]
    %v1029 = vld [vmem:[#allocation11 + $0x50] sm:$0xff]
    %v1030 = vld [vmem:[#allocation11 + $0x58] sm:$0xff]
    %v1031 = vld [vmem:[#allocation11 + $0x60] sm:$0xff]
    %v1032 = vld [vmem:[#allocation11 + $0x68] sm:$0xff]
    %v1033 = vld [vmem:[#allocation11 + $0x70] sm:$0xff]
    %v1034 = vld [vmem:[#allocation11 + $0x78] sm:$0xff]
    %v1035 = vld [vmem:[%s19] sm:$0x1]
    %v1037 = vperm.slane %v1035, 0
    %1039 = vmatpush.msra.mxu0 %v1034
    %1040 = vmatpush.msra.mxu0 %v1033
    %1041 = vmatpush.msra.mxu0 %v1032
    %1042 = vmatpush.msra.mxu0 %v1031
    %1043 = vmatpush.msra.mxu0 %v1030
    %1044 = vmatpush.msra.mxu0 %v1029
    %1045 = vmatpush.msra.mxu0 %v1028
    %1046 = vmatpush.msra.mxu0 %v1027
    %1047 = vmatpush.msra.mxu0 %v1026
    %1048 = vmatpush.msra.mxu0 %v1025
    %1049 = vmatpush.msra.mxu0 %v1024
    %1050 = vmatpush.msra.mxu0 %v1023
    %1051 = vmatpush.msra.mxu0 %v1022
    %1052 = vmatpush.msra.mxu0 %v1021
    %1053 = vmatpush.msra.mxu0 %v1020
    %1054 = vmatpush.msra.mxu0 %v1019
    %1055 = vmatmul.f32.gmra.mxu0 %v1017
    %v1056 = vpop.f32.mrf.mxu0
    %v1057 = vadd.f32 %v1037, %v1056
    %1058 = vmatmul.f32.gmra.mxu0 %v1018
    %v1059 = vpop.f32.mrf.mxu0
    %v1060 = vadd.f32 %v1037, %v1059
    %1061 = vdwg.mxu0
    %vm1062 = vcmp.gt.f32.partialorder %v1057, 0.0
    %vm1063 = vcmp.gt.f32.partialorder %v1060, 0.0
    %v1064 = vmul.f32 %v1057, 0.01
    %v1065 = vmul.f32 %v1060, 0.01
    %v1066 = vsel %vm1062, %v1057, %v1064
    %v1067 = vsel %vm1063, %v1060, %v1065
    %v1068 = vld [vmem:[%s20] sm:$0x1]
    %v1070 = vperm.slane %v1068, 0
    %1072 = vmatpush.bf16.msra.mxu0 0
    %1073 = vmatpush.bf16.msra.mxu0 0
    %1074 = vmatpush.bf16.msra.mxu0 0
    %1075 = vmatpush.bf16.msra.mxu0 0
    %1076 = vmatpush.bf16.msra.mxu0 0
    %1077 = vmatpush.bf16.msra.mxu0 %v988
    %1078 = vmatpush.bf16.msra.mxu0 %v987
    %1079 = vmatpush.bf16.msra.mxu0 %v986
    %1080 = vmatmul.bf16.gmra.mxu0 %v691
    %v1081 = vpop.f32.mrf.mxu0
    %v1082 = vadd.f32 %v1070, %v1081
    %v1083 = vpop.f32.mrf.mxu0
    %v1084 = vadd.f32 %v1070, %v1083
    %1085 = vdwg.mxu0
    %v1086 = vmul.f32 %v1066, 0.5
    %v1087 = vmul.f32 %v1067, 0.5
    %v1088 = vadd.f32 %v1082, %v1086
    %v1089 = vadd.f32 %v1084, %v1087
    %1090 = vst [vmem:[#allocation13] sm:$0xff] %v1088
    %1091 = vst [vmem:[#allocation13 + $0x8] sm:$0xff] %v1089
    // Predicated region
    $region110: #{tpu_custom_call.1} parent=1 // pred_check
      _
    $region111: #{tpu_custom_call.1} parent=1 // pred_check_branch
      %1093 = sbr.rel (0) target = $region113
    $region112: #{tpu_custom_call.1} parent=1 // pred_region
      %1095 = vsyncadd [#allocation4], 0
      %s1096 = sshll.u32 [#allocation13], 4
      %s1097 = int_to_ptr.vmem [resolvable:$true] %s1096
      %s1098 = sshll.u32 %s21, 4
      %s1099 = int_to_ptr.hbm [resolvable:$true] %s1098
      %1104 = dma.vmem_to_hbm [thread:$0]  %s1097, 256, %s1099, [#allocation4], 128, 128, 8
    $region113: #{tpu_custom_call.1} parent=1 // pred_fallthru
      _
    // Predicated region
    $region114: #{tpu_custom_call.1} parent=1 // pred_check
      _
    $region115: #{tpu_custom_call.1} parent=1 // pred_check_branch
      %1106 = sbr.rel (0) target = $region117
    $region116: #{tpu_custom_call.1} parent=1 // pred_region
      %1108 = dma.done [#allocation4], 256
    $region117: #{tpu_custom_call.1} parent=1 // pred_fallthru
      _
    %1109 = vsyncpa [#allocation3], 1
    %1110 = vsyncpa [#allocation6], 1
    %1111 = vsyncpa [#allocation9], 1
    %1112 = vsyncpa [#allocation12], 1
    %1113 = vsyncpa [#allocation4], 1

</llo_original>
